<compile_context>
chip_gen: v5e
topology: v5e:2x2
jax: 0.10.0
libtpu: 0.0.40
codegen_flags: <defaults>
</compile_context>

<pallas_src>
import math

import jax
import jax.numpy as jnp
from jax import lax
from jax.experimental import pallas as pl
from jax.experimental.pallas import tpu as pltpu

# Model hyper-parameters (small, deterministic, defined in-script).
B, S, D = 2, 8, 32          # batch, sequence, hidden
H = 2                       # attention heads
HD = D // H                 # head dim
F = 64                      # FFN hidden dim
VOCAB = 64                  # vocabulary size
LN_EPS = 1e-5


def fused_encoder_kernel(ids_ref, mask_ref, emb_ref, pos_ref, lnp_ref,
                         wq_ref, wk_ref, wv_ref, bq_ref, bk_ref, bv_ref,
                         wo_ref, bo_ref, w1_ref, b1_ref, w2_ref, b2_ref,
                         out_ref):
    """Embedding lookup + one pre-LN transformer encoder layer, all batches.

    Single invocation: every weight/activation is VMEM-resident; batch (B=2)
    and head (H=2) loops are unrolled Python loops.
    """
    emb = emb_ref[...]                  # (VOCAB, D)
    pos = pos_ref[...]                  # (S, D)
    lnp = lnp_ref[...]                  # (4, D): ln1_g, ln1_b, ln2_g, ln2_b
    w1 = w1_ref[...]                    # (D, F)
    b1 = b1_ref[...]                    # (1, F)
    w2 = w2_ref[...]                    # (F, D)
    b2 = b2_ref[...]                    # (1, D)
    bo = bo_ref[...]                    # (1, D)

    token_iota = lax.broadcasted_iota(jnp.int32, (S, VOCAB), 1)

    def layer_norm(v, gamma, beta):
        mu = jnp.mean(v, axis=-1, keepdims=True)
        var = jnp.mean((v - mu) ** 2, axis=-1, keepdims=True)
        return (v - mu) * lax.rsqrt(var + LN_EPS) * gamma + beta

    for b in range(B):                  # unrolled, B is a small Python constant
        # ---- fused embedding lookup: one-hot matmul on the MXU ----
        ids_b = ids_ref[b]                                       # (S, 1) int32
        one_hot = (ids_b == token_iota).astype(jnp.float32)      # (S, VOCAB)
        x = jnp.dot(one_hot, emb, preferred_element_type=jnp.float32) + pos

        add_mask = (1.0 - mask_ref[b]) * (-1e9)                  # (1, S)

        # ---- self attention (pre-LN) ----
        h = layer_norm(x, lnp[0], lnp[1])
        attn = jnp.zeros((S, D), dtype=jnp.float32)
        for hh in range(H):             # heads selected on leading weight axis
            q = jnp.dot(h, wq_ref[hh], preferred_element_type=jnp.float32) + bq_ref[hh]
            k = jnp.dot(h, wk_ref[hh], preferred_element_type=jnp.float32) + bk_ref[hh]
            v = jnp.dot(h, wv_ref[hh], preferred_element_type=jnp.float32) + bv_ref[hh]
            # 1/sqrt(HD) scale is folded into wq/bq at init time.
            s = jnp.dot(q, k.T, preferred_element_type=jnp.float32) + add_mask
            s = s - jnp.max(s, axis=-1, keepdims=True)
            p = jnp.exp(s)
            p = p * pl.reciprocal(jnp.sum(p, axis=-1, keepdims=True), approx=True)
            head = jnp.dot(p, v, preferred_element_type=jnp.float32)          # (S, HD)
            attn = attn + jnp.dot(head, wo_ref[hh],
                                  preferred_element_type=jnp.float32)          # (S, D)
        x = x + attn + bo

        # ---- feed forward (pre-LN) ----
        h2 = layer_norm(x, lnp[2], lnp[3])
        f = jnp.dot(h2, w1, preferred_element_type=jnp.float32) + b1
        # NOTE: tanh-approx GELU (PyTorch nn.GELU default is exact erf; the
        # difference is ~1e-3 relative and irrelevant for this synthetic model).
        f = jax.nn.gelu(f)
        f = jnp.dot(f, w2, preferred_element_type=jnp.float32) + b2
        x = x + f

        out_ref[b] = x


def init_params(key):
    """Deterministic synthetic parameters (no checkpoint load)."""
    keys = jax.random.split(key, 8)
    scale = 0.02
    att_scale = 1.0 / math.sqrt(HD)
    # Fold the attention 1/sqrt(HD) scale into Wq (and its bias) once, at init.
    wq = jax.random.normal(keys[2], (H, D, HD), jnp.float32) * scale * att_scale
    bq = jnp.zeros((H, 1, HD), jnp.float32) * att_scale
    return {
        "emb": jax.random.normal(keys[0], (VOCAB, D), jnp.float32) * scale,
        "pos": jax.random.normal(keys[1], (S, D), jnp.float32) * scale,
        # rows: ln1_gamma, ln1_beta, ln2_gamma, ln2_beta
        "lnp": jnp.concatenate([jnp.ones((1, D)), jnp.zeros((1, D)),
                                jnp.ones((1, D)), jnp.zeros((1, D))],
                               axis=0).astype(jnp.float32),
        "wq": wq,
        "wk": jax.random.normal(keys[3], (H, D, HD), jnp.float32) * scale,
        "wv": jax.random.normal(keys[4], (H, D, HD), jnp.float32) * scale,
        "bq": bq,
        "bk": jnp.zeros((H, 1, HD), jnp.float32),
        "bv": jnp.zeros((H, 1, HD), jnp.float32),
        "wo": jax.random.normal(keys[5], (H, HD, D), jnp.float32) * scale,
        "bo": jnp.zeros((1, D), jnp.float32),
        "w1": jax.random.normal(keys[6], (D, F), jnp.float32) * scale,
        "b1": jnp.zeros((1, F), jnp.float32),
        "w2": jax.random.normal(keys[7], (F, D), jnp.float32) * scale,
        "b2": jnp.zeros((1, D), jnp.float32),
    }


def model_wrapper_forward(input_ids, attention_mask, params):
    """Equivalent of ModelWrapper.forward: returns last_hidden_state (B, S, D)."""
    # Guard against silent mis-tiling: the kernel is specialised to (B, S).
    assert input_ids.shape == (B, S), f"expected input_ids shape {(B, S)}"
    if attention_mask is None:
        attention_mask = jnp.ones((B, S), jnp.float32)
    assert attention_mask.shape == (B, S), f"expected attention_mask shape {(B, S)}"

    ids = input_ids.astype(jnp.int32).reshape(B, S, 1)          # (B, S, 1)
    mask = attention_mask.astype(jnp.float32).reshape(B, 1, S)  # (B, 1, S)

    def full(shape):
        return pl.BlockSpec(shape, lambda i: (0,) * len(shape))

    in_specs = [
        full((B, S, 1)),       # ids
        full((B, 1, S)),       # mask
        full((VOCAB, D)),      # emb
        full((S, D)),          # pos
        full((4, D)),          # ln params
        full((H, D, HD)),      # wq (scale folded in)
        full((H, D, HD)),      # wk
        full((H, D, HD)),      # wv
        full((H, 1, HD)),      # bq
        full((H, 1, HD)),      # bk
        full((H, 1, HD)),      # bv
        full((H, HD, D)),      # wo
        full((1, D)),          # bo
        full((D, F)),          # w1
        full((1, F)),          # b1
        full((F, D)),          # w2
        full((1, D)),          # b2
    ]

    grid_spec = pltpu.PrefetchScalarGridSpec(
        num_scalar_prefetch=0,
        grid=(1,),                              # single invocation, one TC
        in_specs=in_specs,
        out_specs=full((B, S, D)),
    )

    return pl.pallas_call(
        fused_encoder_kernel,
        out_shape=jax.ShapeDtypeStruct((B, S, D), jnp.float32),
        grid_spec=grid_spec,
        compiler_params=pltpu.CompilerParams(dimension_semantics=("arbitrary",)),
    )(ids, mask, params["emb"], params["pos"], params["lnp"],
      params["wq"], params["wk"], params["wv"],
      params["bq"], params["bk"], params["bv"],
      params["wo"], params["bo"],
      params["w1"], params["b1"], params["w2"], params["b2"])


if __name__ == "__main__":
    key = jax.random.PRNGKey(0)
    pkey, ikey = jax.random.split(key)
    params = init_params(pkey)

    input_ids = jax.random.randint(ikey, (B, S), 0, VOCAB, dtype=jnp.int32)
    attention_mask = jnp.array([[1, 1, 1, 1, 1, 1, 0, 0],
                                [1, 1, 1, 1, 1, 1, 1, 1]], dtype=jnp.float32)

    last_hidden_state = model_wrapper_forward(input_ids, attention_mask, params)
    jax.block_until_ready(last_hidden_state)

    assert last_hidden_state.shape == (B, S, D)
    assert last_hidden_state.dtype == jnp.float32
    assert bool(jnp.all(jnp.isfinite(last_hidden_state)))
    print("KERNEL_OK")
</pallas_src>

<mosaic_0001>
module attributes {stable_mosaic.version = 11 : i64} {
  func.func @fused_encoder_kernel(%arg0: i32, %arg1: memref<2x8x1xi32, #tpu.memory_space<vmem>>, %arg2: memref<2x1x8xf32, #tpu.memory_space<vmem>>, %arg3: memref<64x32xf32, #tpu.memory_space<vmem>>, %arg4: memref<8x32xf32, #tpu.memory_space<vmem>>, %arg5: memref<4x32xf32, #tpu.memory_space<vmem>>, %arg6: memref<2x32x16xf32, #tpu.memory_space<vmem>>, %arg7: memref<2x32x16xf32, #tpu.memory_space<vmem>>, %arg8: memref<2x32x16xf32, #tpu.memory_space<vmem>>, %arg9: memref<2x1x16xf32, #tpu.memory_space<vmem>>, %arg10: memref<2x1x16xf32, #tpu.memory_space<vmem>>, %arg11: memref<2x1x16xf32, #tpu.memory_space<vmem>>, %arg12: memref<2x16x32xf32, #tpu.memory_space<vmem>>, %arg13: memref<1x32xf32, #tpu.memory_space<vmem>>, %arg14: memref<32x64xf32, #tpu.memory_space<vmem>>, %arg15: memref<1x64xf32, #tpu.memory_space<vmem>>, %arg16: memref<64x32xf32, #tpu.memory_space<vmem>>, %arg17: memref<1x32xf32, #tpu.memory_space<vmem>>, %arg18: memref<2x8x32xf32, #tpu.memory_space<vmem>>) attributes {dimension_semantics = [#tpu.dimension_semantics<arbitrary>], iteration_bounds = array<i64: 1>, scalar_prefetch = 0 : i64, scratch_operands = 0 : i64, tpu.core_type = #tpu.core_type<tc>, window_params = [{pipeline_mode = #tpu.pipeline_mode<synchronous>, transform_indices = @transform_0, window_bounds = array<i64: 2, 8, 1>}, {pipeline_mode = #tpu.pipeline_mode<synchronous>, transform_indices = @transform_1, window_bounds = array<i64: 2, 1, 8>}, {pipeline_mode = #tpu.pipeline_mode<synchronous>, transform_indices = @transform_2, window_bounds = array<i64: 64, 32>}, {pipeline_mode = #tpu.pipeline_mode<synchronous>, transform_indices = @transform_3, window_bounds = array<i64: 8, 32>}, {pipeline_mode = #tpu.pipeline_mode<synchronous>, transform_indices = @transform_4, window_bounds = array<i64: 4, 32>}, {pipeline_mode = #tpu.pipeline_mode<synchronous>, transform_indices = @transform_5, window_bounds = array<i64: 2, 32, 16>}, {pipeline_mode = #tpu.pipeline_mode<synchronous>, transform_indices = @transform_6, window_bounds = array<i64: 2, 32, 16>}, {pipeline_mode = #tpu.pipeline_mode<synchronous>, transform_indices = @transform_7, window_bounds = array<i64: 2, 32, 16>}, {pipeline_mode = #tpu.pipeline_mode<synchronous>, transform_indices = @transform_8, window_bounds = array<i64: 2, 1, 16>}, {pipeline_mode = #tpu.pipeline_mode<synchronous>, transform_indices = @transform_9, window_bounds = array<i64: 2, 1, 16>}, {pipeline_mode = #tpu.pipeline_mode<synchronous>, transform_indices = @transform_10, window_bounds = array<i64: 2, 1, 16>}, {pipeline_mode = #tpu.pipeline_mode<synchronous>, transform_indices = @transform_11, window_bounds = array<i64: 2, 16, 32>}, {pipeline_mode = #tpu.pipeline_mode<synchronous>, transform_indices = @transform_12, window_bounds = array<i64: 1, 32>}, {pipeline_mode = #tpu.pipeline_mode<synchronous>, transform_indices = @transform_13, window_bounds = array<i64: 32, 64>}, {pipeline_mode = #tpu.pipeline_mode<synchronous>, transform_indices = @transform_14, window_bounds = array<i64: 1, 64>}, {pipeline_mode = #tpu.pipeline_mode<synchronous>, transform_indices = @transform_15, window_bounds = array<i64: 64, 32>}, {pipeline_mode = #tpu.pipeline_mode<synchronous>, transform_indices = @transform_16, window_bounds = array<i64: 1, 32>}, {pipeline_mode = #tpu.pipeline_mode<synchronous>, transform_indices = @transform_17, window_bounds = array<i64: 2, 8, 32>}]} {
    %c0 = arith.constant 0 : index
    %c0_0 = arith.constant 0 : index
    %0 = vector.load %arg3[%c0, %c0_0] : memref<64x32xf32, #tpu.memory_space<vmem>>, vector<64x32xf32>
    %c0_1 = arith.constant 0 : index
    %c0_2 = arith.constant 0 : index
    %1 = vector.load %arg4[%c0_1, %c0_2] : memref<8x32xf32, #tpu.memory_space<vmem>>, vector<8x32xf32>
    %c0_3 = arith.constant 0 : index
    %c0_4 = arith.constant 0 : index
    %2 = vector.load %arg5[%c0_3, %c0_4] : memref<4x32xf32, #tpu.memory_space<vmem>>, vector<4x32xf32>
    %c0_5 = arith.constant 0 : index
    %c0_6 = arith.constant 0 : index
    %3 = vector.load %arg14[%c0_5, %c0_6] : memref<32x64xf32, #tpu.memory_space<vmem>>, vector<32x64xf32>
    %c0_7 = arith.constant 0 : index
    %c0_8 = arith.constant 0 : index
    %4 = vector.load %arg15[%c0_7, %c0_8] : memref<1x64xf32, #tpu.memory_space<vmem>>, vector<1x64xf32>
    %c0_9 = arith.constant 0 : index
    %c0_10 = arith.constant 0 : index
    %5 = vector.load %arg16[%c0_9, %c0_10] : memref<64x32xf32, #tpu.memory_space<vmem>>, vector<64x32xf32>
    %c0_11 = arith.constant 0 : index
    %c0_12 = arith.constant 0 : index
    %6 = vector.load %arg17[%c0_11, %c0_12] : memref<1x32xf32, #tpu.memory_space<vmem>>, vector<1x32xf32>
    %c0_13 = arith.constant 0 : index
    %c0_14 = arith.constant 0 : index
    %7 = vector.load %arg13[%c0_13, %c0_14] : memref<1x32xf32, #tpu.memory_space<vmem>>, vector<1x32xf32>
    %8 = tpu.iota {dimensions = array<i32: 1>} : vector<8x64xi32>
    %c0_15 = arith.constant 0 : index
    %c0_16 = arith.constant 0 : index
    %c0_17 = arith.constant 0 : index
    %9 = vector.load %arg1[%c0_15, %c0_16, %c0_17] : memref<2x8x1xi32, #tpu.memory_space<vmem>>, vector<1x8x1xi32>
    %10 = vector.shape_cast %9 : vector<1x8x1xi32> to vector<8x1xi32>
    %11 = vector.broadcast %10 : vector<8x1xi32> to vector<8x64xi32>
    %12 = arith.cmpi eq, %11, %8 : vector<8x64xi32>
    %13 = arith.extui %12 : vector<8x64xi1> to vector<8x64xi32>
    %14 = arith.sitofp %13 : vector<8x64xi32> to vector<8x64xf32>
    %cst = arith.constant dense<0.000000e+00> : vector<8x32xf32>
    %15 = tpu.matmul %14, %0, %cst {dimension_numbers = #tpu.dot_dimension_numbers<[1], [0], [0], [1], [0, 0, 1, 1], [], []>} : vector<8x64xf32>, vector<64x32xf32>, vector<8x32xf32> -> vector<8x32xf32>
    %16 = arith.addf %15, %1 : vector<8x32xf32>
    %c0_18 = arith.constant 0 : index
    %c0_19 = arith.constant 0 : index
    %c0_20 = arith.constant 0 : index
    %17 = vector.load %arg2[%c0_18, %c0_19, %c0_20] : memref<2x1x8xf32, #tpu.memory_space<vmem>>, vector<1x1x8xf32>
    %18 = vector.shape_cast %17 : vector<1x1x8xf32> to vector<1x8xf32>
    %cst_21 = arith.constant 1.000000e+00 : f32
    %19 = vector.broadcast %cst_21 : f32 to vector<1x8xf32>
    %20 = arith.subf %19, %18 : vector<1x8xf32>
    %cst_22 = arith.constant -1.000000e+09 : f32
    %21 = vector.broadcast %cst_22 : f32 to vector<1x8xf32>
    %22 = arith.mulf %20, %21 : vector<1x8xf32>
    %23 = vector.extract_strided_slice %2 {offsets = [0, 0], sizes = [1, 32], strides = [1, 1]} : vector<4x32xf32> to vector<1x32xf32>
    %24 = vector.shape_cast %23 : vector<1x32xf32> to vector<32xf32>
    %25 = vector.extract_strided_slice %2 {offsets = [1, 0], sizes = [1, 32], strides = [1, 1]} : vector<4x32xf32> to vector<1x32xf32>
    %26 = vector.shape_cast %25 : vector<1x32xf32> to vector<32xf32>
    %cst_23 = arith.constant dense<0.000000e+00> : vector<8xf32>
    %27 = vector.multi_reduction <add>, %16, %cst_23 [1] : vector<8x32xf32> to vector<8xf32>
    %28 = vector.shape_cast %27 : vector<8xf32> to vector<8x1xf32>
    %cst_24 = arith.constant 3.200000e+01 : f32
    %29 = vector.broadcast %cst_24 : f32 to vector<8x1xf32>
    %30 = arith.divf %28, %29 : vector<8x1xf32>
    %31 = vector.broadcast %30 : vector<8x1xf32> to vector<8x32xf32>
    %32 = arith.subf %16, %31 : vector<8x32xf32>
    %33 = arith.mulf %32, %32 : vector<8x32xf32>
    %cst_25 = arith.constant dense<0.000000e+00> : vector<8xf32>
    %34 = vector.multi_reduction <add>, %33, %cst_25 [1] : vector<8x32xf32> to vector<8xf32>
    %35 = vector.shape_cast %34 : vector<8xf32> to vector<8x1xf32>
    %cst_26 = arith.constant 3.200000e+01 : f32
    %36 = vector.broadcast %cst_26 : f32 to vector<8x1xf32>
    %37 = arith.divf %35, %36 : vector<8x1xf32>
    %38 = vector.broadcast %30 : vector<8x1xf32> to vector<8x32xf32>
    %39 = arith.subf %16, %38 : vector<8x32xf32>
    %cst_27 = arith.constant 9.99999974E-6 : f32
    %40 = vector.broadcast %cst_27 : f32 to vector<8x1xf32>
    %41 = arith.addf %37, %40 : vector<8x1xf32>
    %42 = math.rsqrt %41 : vector<8x1xf32>
    %43 = vector.broadcast %42 : vector<8x1xf32> to vector<8x32xf32>
    %44 = arith.mulf %39, %43 : vector<8x32xf32>
    %45 = vector.shape_cast %24 : vector<32xf32> to vector<1x32xf32>
    %46 = vector.broadcast %45 : vector<1x32xf32> to vector<8x32xf32>
    %47 = arith.mulf %44, %46 : vector<8x32xf32>
    %48 = vector.shape_cast %26 : vector<32xf32> to vector<1x32xf32>
    %49 = vector.broadcast %48 : vector<1x32xf32> to vector<8x32xf32>
    %50 = arith.addf %47, %49 : vector<8x32xf32>
    %cst_28 = arith.constant 0.000000e+00 : f32
    %51 = vector.broadcast %cst_28 : f32 to vector<8x32xf32>
    %c0_29 = arith.constant 0 : index
    %c0_30 = arith.constant 0 : index
    %c0_31 = arith.constant 0 : index
    %52 = vector.load %arg6[%c0_29, %c0_30, %c0_31] : memref<2x32x16xf32, #tpu.memory_space<vmem>>, vector<1x32x16xf32>
    %53 = vector.shape_cast %52 : vector<1x32x16xf32> to vector<32x16xf32>
    %cst_32 = arith.constant dense<0.000000e+00> : vector<8x16xf32>
    %54 = tpu.matmul %50, %53, %cst_32 {dimension_numbers = #tpu.dot_dimension_numbers<[1], [0], [0], [1], [0, 0, 1, 1], [], []>} : vector<8x32xf32>, vector<32x16xf32>, vector<8x16xf32> -> vector<8x16xf32>
    %c0_33 = arith.constant 0 : index
    %c0_34 = arith.constant 0 : index
    %c0_35 = arith.constant 0 : index
    %55 = vector.load %arg9[%c0_33, %c0_34, %c0_35] : memref<2x1x16xf32, #tpu.memory_space<vmem>>, vector<1x1x16xf32>
    %56 = vector.shape_cast %55 : vector<1x1x16xf32> to vector<1x16xf32>
    %57 = vector.broadcast %56 : vector<1x16xf32> to vector<8x16xf32>
    %58 = arith.addf %54, %57 : vector<8x16xf32>
    %c0_36 = arith.constant 0 : index
    %c0_37 = arith.constant 0 : index
    %c0_38 = arith.constant 0 : index
    %59 = vector.load %arg7[%c0_36, %c0_37, %c0_38] : memref<2x32x16xf32, #tpu.memory_space<vmem>>, vector<1x32x16xf32>
    %60 = vector.shape_cast %59 : vector<1x32x16xf32> to vector<32x16xf32>
    %cst_39 = arith.constant dense<0.000000e+00> : vector<8x16xf32>
    %61 = tpu.matmul %50, %60, %cst_39 {dimension_numbers = #tpu.dot_dimension_numbers<[1], [0], [0], [1], [0, 0, 1, 1], [], []>} : vector<8x32xf32>, vector<32x16xf32>, vector<8x16xf32> -> vector<8x16xf32>
    %c0_40 = arith.constant 0 : index
    %c0_41 = arith.constant 0 : index
    %c0_42 = arith.constant 0 : index
    %62 = vector.load %arg10[%c0_40, %c0_41, %c0_42] : memref<2x1x16xf32, #tpu.memory_space<vmem>>, vector<1x1x16xf32>
    %63 = vector.shape_cast %62 : vector<1x1x16xf32> to vector<1x16xf32>
    %64 = vector.broadcast %63 : vector<1x16xf32> to vector<8x16xf32>
    %65 = arith.addf %61, %64 : vector<8x16xf32>
    %c0_43 = arith.constant 0 : index
    %c0_44 = arith.constant 0 : index
    %c0_45 = arith.constant 0 : index
    %66 = vector.load %arg8[%c0_43, %c0_44, %c0_45] : memref<2x32x16xf32, #tpu.memory_space<vmem>>, vector<1x32x16xf32>
    %67 = vector.shape_cast %66 : vector<1x32x16xf32> to vector<32x16xf32>
    %cst_46 = arith.constant dense<0.000000e+00> : vector<8x16xf32>
    %68 = tpu.matmul %50, %67, %cst_46 {dimension_numbers = #tpu.dot_dimension_numbers<[1], [0], [0], [1], [0, 0, 1, 1], [], []>} : vector<8x32xf32>, vector<32x16xf32>, vector<8x16xf32> -> vector<8x16xf32>
    %c0_47 = arith.constant 0 : index
    %c0_48 = arith.constant 0 : index
    %c0_49 = arith.constant 0 : index
    %69 = vector.load %arg11[%c0_47, %c0_48, %c0_49] : memref<2x1x16xf32, #tpu.memory_space<vmem>>, vector<1x1x16xf32>
    %70 = vector.shape_cast %69 : vector<1x1x16xf32> to vector<1x16xf32>
    %71 = vector.broadcast %70 : vector<1x16xf32> to vector<8x16xf32>
    %72 = arith.addf %68, %71 : vector<8x16xf32>
    %73 = tpu.transpose %65, [1, 0] : vector<8x16xf32> -> vector<16x8xf32>
    %cst_50 = arith.constant dense<0.000000e+00> : vector<8x8xf32>
    %74 = tpu.matmul %58, %73, %cst_50 {dimension_numbers = #tpu.dot_dimension_numbers<[1], [0], [0], [1], [0, 0, 1, 1], [], []>} : vector<8x16xf32>, vector<16x8xf32>, vector<8x8xf32> -> vector<8x8xf32>
    %75 = vector.broadcast %22 : vector<1x8xf32> to vector<8x8xf32>
    %76 = arith.addf %74, %75 : vector<8x8xf32>
    %cst_51 = arith.constant dense<0xFF800000> : vector<8xf32>
    %77 = vector.multi_reduction <maximumf>, %76, %cst_51 [1] : vector<8x8xf32> to vector<8xf32>
    %78 = vector.shape_cast %77 : vector<8xf32> to vector<8x1xf32>
    %79 = vector.broadcast %78 : vector<8x1xf32> to vector<8x8xf32>
    %80 = arith.subf %76, %79 : vector<8x8xf32>
    %81 = math.exp %80 : vector<8x8xf32>
    %cst_52 = arith.constant dense<0.000000e+00> : vector<8xf32>
    %82 = vector.multi_reduction <add>, %81, %cst_52 [1] : vector<8x8xf32> to vector<8xf32>
    %83 = vector.shape_cast %82 : vector<8xf32> to vector<8x1xf32>
    %84 = tpu.reciprocal %83 {approx = true} : vector<8x1xf32> -> vector<8x1xf32>
    %85 = vector.broadcast %84 : vector<8x1xf32> to vector<8x8xf32>
    %86 = arith.mulf %81, %85 : vector<8x8xf32>
    %cst_53 = arith.constant dense<0.000000e+00> : vector<8x16xf32>
    %87 = tpu.matmul %86, %72, %cst_53 {dimension_numbers = #tpu.dot_dimension_numbers<[1], [0], [0], [1], [0, 0, 1, 1], [], []>} : vector<8x8xf32>, vector<8x16xf32>, vector<8x16xf32> -> vector<8x16xf32>
    %c0_54 = arith.constant 0 : index
    %c0_55 = arith.constant 0 : index
    %c0_56 = arith.constant 0 : index
    %88 = vector.load %arg12[%c0_54, %c0_55, %c0_56] : memref<2x16x32xf32, #tpu.memory_space<vmem>>, vector<1x16x32xf32>
    %89 = vector.shape_cast %88 : vector<1x16x32xf32> to vector<16x32xf32>
    %cst_57 = arith.constant dense<0.000000e+00> : vector<8x32xf32>
    %90 = tpu.matmul %87, %89, %cst_57 {dimension_numbers = #tpu.dot_dimension_numbers<[1], [0], [0], [1], [0, 0, 1, 1], [], []>} : vector<8x16xf32>, vector<16x32xf32>, vector<8x32xf32> -> vector<8x32xf32>
    %91 = arith.addf %51, %90 : vector<8x32xf32>
    %c1 = arith.constant 1 : index
    %c0_58 = arith.constant 0 : index
    %c0_59 = arith.constant 0 : index
    %92 = vector.load %arg6[%c1, %c0_58, %c0_59] : memref<2x32x16xf32, #tpu.memory_space<vmem>>, vector<1x32x16xf32>
    %93 = vector.shape_cast %92 : vector<1x32x16xf32> to vector<32x16xf32>
    %cst_60 = arith.constant dense<0.000000e+00> : vector<8x16xf32>
    %94 = tpu.matmul %50, %93, %cst_60 {dimension_numbers = #tpu.dot_dimension_numbers<[1], [0], [0], [1], [0, 0, 1, 1], [], []>} : vector<8x32xf32>, vector<32x16xf32>, vector<8x16xf32> -> vector<8x16xf32>
    %c1_61 = arith.constant 1 : index
    %c0_62 = arith.constant 0 : index
    %c0_63 = arith.constant 0 : index
    %95 = vector.load %arg9[%c1_61, %c0_62, %c0_63] : memref<2x1x16xf32, #tpu.memory_space<vmem>>, vector<1x1x16xf32>
    %96 = vector.shape_cast %95 : vector<1x1x16xf32> to vector<1x16xf32>
    %97 = vector.broadcast %96 : vector<1x16xf32> to vector<8x16xf32>
    %98 = arith.addf %94, %97 : vector<8x16xf32>
    %c1_64 = arith.constant 1 : index
    %c0_65 = arith.constant 0 : index
    %c0_66 = arith.constant 0 : index
    %99 = vector.load %arg7[%c1_64, %c0_65, %c0_66] : memref<2x32x16xf32, #tpu.memory_space<vmem>>, vector<1x32x16xf32>
    %100 = vector.shape_cast %99 : vector<1x32x16xf32> to vector<32x16xf32>
    %cst_67 = arith.constant dense<0.000000e+00> : vector<8x16xf32>
    %101 = tpu.matmul %50, %100, %cst_67 {dimension_numbers = #tpu.dot_dimension_numbers<[1], [0], [0], [1], [0, 0, 1, 1], [], []>} : vector<8x32xf32>, vector<32x16xf32>, vector<8x16xf32> -> vector<8x16xf32>
    %c1_68 = arith.constant 1 : index
    %c0_69 = arith.constant 0 : index
    %c0_70 = arith.constant 0 : index
    %102 = vector.load %arg10[%c1_68, %c0_69, %c0_70] : memref<2x1x16xf32, #tpu.memory_space<vmem>>, vector<1x1x16xf32>
    %103 = vector.shape_cast %102 : vector<1x1x16xf32> to vector<1x16xf32>
    %104 = vector.broadcast %103 : vector<1x16xf32> to vector<8x16xf32>
    %105 = arith.addf %101, %104 : vector<8x16xf32>
    %c1_71 = arith.constant 1 : index
    %c0_72 = arith.constant 0 : index
    %c0_73 = arith.constant 0 : index
    %106 = vector.load %arg8[%c1_71, %c0_72, %c0_73] : memref<2x32x16xf32, #tpu.memory_space<vmem>>, vector<1x32x16xf32>
    %107 = vector.shape_cast %106 : vector<1x32x16xf32> to vector<32x16xf32>
    %cst_74 = arith.constant dense<0.000000e+00> : vector<8x16xf32>
    %108 = tpu.matmul %50, %107, %cst_74 {dimension_numbers = #tpu.dot_dimension_numbers<[1], [0], [0], [1], [0, 0, 1, 1], [], []>} : vector<8x32xf32>, vector<32x16xf32>, vector<8x16xf32> -> vector<8x16xf32>
    %c1_75 = arith.constant 1 : index
    %c0_76 = arith.constant 0 : index
    %c0_77 = arith.constant 0 : index
    %109 = vector.load %arg11[%c1_75, %c0_76, %c0_77] : memref<2x1x16xf32, #tpu.memory_space<vmem>>, vector<1x1x16xf32>
    %110 = vector.shape_cast %109 : vector<1x1x16xf32> to vector<1x16xf32>
    %111 = vector.broadcast %110 : vector<1x16xf32> to vector<8x16xf32>
    %112 = arith.addf %108, %111 : vector<8x16xf32>
    %113 = tpu.transpose %105, [1, 0] : vector<8x16xf32> -> vector<16x8xf32>
    %cst_78 = arith.constant dense<0.000000e+00> : vector<8x8xf32>
    %114 = tpu.matmul %98, %113, %cst_78 {dimension_numbers = #tpu.dot_dimension_numbers<[1], [0], [0], [1], [0, 0, 1, 1], [], []>} : vector<8x16xf32>, vector<16x8xf32>, vector<8x8xf32> -> vector<8x8xf32>
    %115 = vector.broadcast %22 : vector<1x8xf32> to vector<8x8xf32>
    %116 = arith.addf %114, %115 : vector<8x8xf32>
    %cst_79 = arith.constant dense<0xFF800000> : vector<8xf32>
    %117 = vector.multi_reduction <maximumf>, %116, %cst_79 [1] : vector<8x8xf32> to vector<8xf32>
    %118 = vector.shape_cast %117 : vector<8xf32> to vector<8x1xf32>
    %119 = vector.broadcast %118 : vector<8x1xf32> to vector<8x8xf32>
    %120 = arith.subf %116, %119 : vector<8x8xf32>
    %121 = math.exp %120 : vector<8x8xf32>
    %cst_80 = arith.constant dense<0.000000e+00> : vector<8xf32>
    %122 = vector.multi_reduction <add>, %121, %cst_80 [1] : vector<8x8xf32> to vector<8xf32>
    %123 = vector.shape_cast %122 : vector<8xf32> to vector<8x1xf32>
    %124 = tpu.reciprocal %123 {approx = true} : vector<8x1xf32> -> vector<8x1xf32>
    %125 = vector.broadcast %124 : vector<8x1xf32> to vector<8x8xf32>
    %126 = arith.mulf %121, %125 : vector<8x8xf32>
    %cst_81 = arith.constant dense<0.000000e+00> : vector<8x16xf32>
    %127 = tpu.matmul %126, %112, %cst_81 {dimension_numbers = #tpu.dot_dimension_numbers<[1], [0], [0], [1], [0, 0, 1, 1], [], []>} : vector<8x8xf32>, vector<8x16xf32>, vector<8x16xf32> -> vector<8x16xf32>
    %c1_82 = arith.constant 1 : index
    %c0_83 = arith.constant 0 : index
    %c0_84 = arith.constant 0 : index
    %128 = vector.load %arg12[%c1_82, %c0_83, %c0_84] : memref<2x16x32xf32, #tpu.memory_space<vmem>>, vector<1x16x32xf32>
    %129 = vector.shape_cast %128 : vector<1x16x32xf32> to vector<16x32xf32>
    %cst_85 = arith.constant dense<0.000000e+00> : vector<8x32xf32>
    %130 = tpu.matmul %127, %129, %cst_85 {dimension_numbers = #tpu.dot_dimension_numbers<[1], [0], [0], [1], [0, 0, 1, 1], [], []>} : vector<8x16xf32>, vector<16x32xf32>, vector<8x32xf32> -> vector<8x32xf32>
    %131 = arith.addf %91, %130 : vector<8x32xf32>
    %132 = arith.addf %16, %131 : vector<8x32xf32>
    %133 = vector.broadcast %7 : vector<1x32xf32> to vector<8x32xf32>
    %134 = arith.addf %132, %133 : vector<8x32xf32>
    %135 = vector.extract_strided_slice %2 {offsets = [2, 0], sizes = [1, 32], strides = [1, 1]} : vector<4x32xf32> to vector<1x32xf32>
    %136 = vector.shape_cast %135 : vector<1x32xf32> to vector<32xf32>
    %137 = vector.extract_strided_slice %2 {offsets = [3, 0], sizes = [1, 32], strides = [1, 1]} : vector<4x32xf32> to vector<1x32xf32>
    %138 = vector.shape_cast %137 : vector<1x32xf32> to vector<32xf32>
    %cst_86 = arith.constant dense<0.000000e+00> : vector<8xf32>
    %139 = vector.multi_reduction <add>, %134, %cst_86 [1] : vector<8x32xf32> to vector<8xf32>
    %140 = vector.shape_cast %139 : vector<8xf32> to vector<8x1xf32>
    %cst_87 = arith.constant 3.200000e+01 : f32
    %141 = vector.broadcast %cst_87 : f32 to vector<8x1xf32>
    %142 = arith.divf %140, %141 : vector<8x1xf32>
    %143 = vector.broadcast %142 : vector<8x1xf32> to vector<8x32xf32>
    %144 = arith.subf %134, %143 : vector<8x32xf32>
    %145 = arith.mulf %144, %144 : vector<8x32xf32>
    %cst_88 = arith.constant dense<0.000000e+00> : vector<8xf32>
    %146 = vector.multi_reduction <add>, %145, %cst_88 [1] : vector<8x32xf32> to vector<8xf32>
    %147 = vector.shape_cast %146 : vector<8xf32> to vector<8x1xf32>
    %cst_89 = arith.constant 3.200000e+01 : f32
    %148 = vector.broadcast %cst_89 : f32 to vector<8x1xf32>
    %149 = arith.divf %147, %148 : vector<8x1xf32>
    %150 = vector.broadcast %142 : vector<8x1xf32> to vector<8x32xf32>
    %151 = arith.subf %134, %150 : vector<8x32xf32>
    %cst_90 = arith.constant 9.99999974E-6 : f32
    %152 = vector.broadcast %cst_90 : f32 to vector<8x1xf32>
    %153 = arith.addf %149, %152 : vector<8x1xf32>
    %154 = math.rsqrt %153 : vector<8x1xf32>
    %155 = vector.broadcast %154 : vector<8x1xf32> to vector<8x32xf32>
    %156 = arith.mulf %151, %155 : vector<8x32xf32>
    %157 = vector.shape_cast %136 : vector<32xf32> to vector<1x32xf32>
    %158 = vector.broadcast %157 : vector<1x32xf32> to vector<8x32xf32>
    %159 = arith.mulf %156, %158 : vector<8x32xf32>
    %160 = vector.shape_cast %138 : vector<32xf32> to vector<1x32xf32>
    %161 = vector.broadcast %160 : vector<1x32xf32> to vector<8x32xf32>
    %162 = arith.addf %159, %161 : vector<8x32xf32>
    %cst_91 = arith.constant dense<0.000000e+00> : vector<8x64xf32>
    %163 = tpu.matmul %162, %3, %cst_91 {dimension_numbers = #tpu.dot_dimension_numbers<[1], [0], [0], [1], [0, 0, 1, 1], [], []>} : vector<8x32xf32>, vector<32x64xf32>, vector<8x64xf32> -> vector<8x64xf32>
    %164 = vector.broadcast %4 : vector<1x64xf32> to vector<8x64xf32>
    %165 = arith.addf %163, %164 : vector<8x64xf32>
    %166 = arith.mulf %165, %165 : vector<8x64xf32>
    %167 = arith.mulf %165, %166 : vector<8x64xf32>
    %cst_92 = arith.constant 4.471500e-02 : f32
    %168 = vector.broadcast %cst_92 : f32 to vector<8x64xf32>
    %169 = arith.mulf %168, %167 : vector<8x64xf32>
    %170 = arith.addf %165, %169 : vector<8x64xf32>
    %cst_93 = arith.constant 0.797884583 : f32
    %171 = vector.broadcast %cst_93 : f32 to vector<8x64xf32>
    %172 = arith.mulf %171, %170 : vector<8x64xf32>
    %173 = math.tanh %172 : vector<8x64xf32>
    %cst_94 = arith.constant 1.000000e+00 : f32
    %174 = vector.broadcast %cst_94 : f32 to vector<8x64xf32>
    %175 = arith.addf %174, %173 : vector<8x64xf32>
    %cst_95 = arith.constant 5.000000e-01 : f32
    %176 = vector.broadcast %cst_95 : f32 to vector<8x64xf32>
    %177 = arith.mulf %176, %175 : vector<8x64xf32>
    %178 = arith.mulf %165, %177 : vector<8x64xf32>
    %cst_96 = arith.constant dense<0.000000e+00> : vector<8x32xf32>
    %179 = tpu.matmul %178, %5, %cst_96 {dimension_numbers = #tpu.dot_dimension_numbers<[1], [0], [0], [1], [0, 0, 1, 1], [], []>} : vector<8x64xf32>, vector<64x32xf32>, vector<8x32xf32> -> vector<8x32xf32>
    %180 = vector.broadcast %6 : vector<1x32xf32> to vector<8x32xf32>
    %181 = arith.addf %179, %180 : vector<8x32xf32>
    %182 = arith.addf %134, %181 : vector<8x32xf32>
    %c0_97 = arith.constant 0 : index
    %c0_98 = arith.constant 0 : index
    %c0_99 = arith.constant 0 : index
    %183 = vector.load %arg18[%c0_97, %c0_98, %c0_99] : memref<2x8x32xf32, #tpu.memory_space<vmem>>, vector<1x8x32xf32>
    %184 = vector.shape_cast %183 : vector<1x8x32xf32> to vector<8x32xf32>
    %185 = vector.shape_cast %182 : vector<8x32xf32> to vector<1x8x32xf32>
    tpu.vector_store %arg18[%c0_97, %c0_98, %c0_99], %185 {strides = array<i32>} : memref<2x8x32xf32, #tpu.memory_space<vmem>>, vector<1x8x32xf32>,
    %c1_100 = arith.constant 1 : index
    %c0_101 = arith.constant 0 : index
    %c0_102 = arith.constant 0 : index
    %186 = vector.load %arg1[%c1_100, %c0_101, %c0_102] : memref<2x8x1xi32, #tpu.memory_space<vmem>>, vector<1x8x1xi32>
    %187 = vector.shape_cast %186 : vector<1x8x1xi32> to vector<8x1xi32>
    %188 = vector.broadcast %187 : vector<8x1xi32> to vector<8x64xi32>
    %189 = arith.cmpi eq, %188, %8 : vector<8x64xi32>
    %190 = arith.extui %189 : vector<8x64xi1> to vector<8x64xi32>
    %191 = arith.sitofp %190 : vector<8x64xi32> to vector<8x64xf32>
    %cst_103 = arith.constant dense<0.000000e+00> : vector<8x32xf32>
    %192 = tpu.matmul %191, %0, %cst_103 {dimension_numbers = #tpu.dot_dimension_numbers<[1], [0], [0], [1], [0, 0, 1, 1], [], []>} : vector<8x64xf32>, vector<64x32xf32>, vector<8x32xf32> -> vector<8x32xf32>
    %193 = arith.addf %192, %1 : vector<8x32xf32>
    %c1_104 = arith.constant 1 : index
    %c0_105 = arith.constant 0 : index
    %c0_106 = arith.constant 0 : index
    %194 = vector.load %arg2[%c1_104, %c0_105, %c0_106] : memref<2x1x8xf32, #tpu.memory_space<vmem>>, vector<1x1x8xf32>
    %195 = vector.shape_cast %194 : vector<1x1x8xf32> to vector<1x8xf32>
    %cst_107 = arith.constant 1.000000e+00 : f32
    %196 = vector.broadcast %cst_107 : f32 to vector<1x8xf32>
    %197 = arith.subf %196, %195 : vector<1x8xf32>
    %cst_108 = arith.constant -1.000000e+09 : f32
    %198 = vector.broadcast %cst_108 : f32 to vector<1x8xf32>
    %199 = arith.mulf %197, %198 : vector<1x8xf32>
    %200 = vector.extract_strided_slice %2 {offsets = [0, 0], sizes = [1, 32], strides = [1, 1]} : vector<4x32xf32> to vector<1x32xf32>
    %201 = vector.shape_cast %200 : vector<1x32xf32> to vector<32xf32>
    %202 = vector.extract_strided_slice %2 {offsets = [1, 0], sizes = [1, 32], strides = [1, 1]} : vector<4x32xf32> to vector<1x32xf32>
    %203 = vector.shape_cast %202 : vector<1x32xf32> to vector<32xf32>
    %cst_109 = arith.constant dense<0.000000e+00> : vector<8xf32>
    %204 = vector.multi_reduction <add>, %193, %cst_109 [1] : vector<8x32xf32> to vector<8xf32>
    %205 = vector.shape_cast %204 : vector<8xf32> to vector<8x1xf32>
    %cst_110 = arith.constant 3.200000e+01 : f32
    %206 = vector.broadcast %cst_110 : f32 to vector<8x1xf32>
    %207 = arith.divf %205, %206 : vector<8x1xf32>
    %208 = vector.broadcast %207 : vector<8x1xf32> to vector<8x32xf32>
    %209 = arith.subf %193, %208 : vector<8x32xf32>
    %210 = arith.mulf %209, %209 : vector<8x32xf32>
    %cst_111 = arith.constant dense<0.000000e+00> : vector<8xf32>
    %211 = vector.multi_reduction <add>, %210, %cst_111 [1] : vector<8x32xf32> to vector<8xf32>
    %212 = vector.shape_cast %211 : vector<8xf32> to vector<8x1xf32>
    %cst_112 = arith.constant 3.200000e+01 : f32
    %213 = vector.broadcast %cst_112 : f32 to vector<8x1xf32>
    %214 = arith.divf %212, %213 : vector<8x1xf32>
    %215 = vector.broadcast %207 : vector<8x1xf32> to vector<8x32xf32>
    %216 = arith.subf %193, %215 : vector<8x32xf32>
    %cst_113 = arith.constant 9.99999974E-6 : f32
    %217 = vector.broadcast %cst_113 : f32 to vector<8x1xf32>
    %218 = arith.addf %214, %217 : vector<8x1xf32>
    %219 = math.rsqrt %218 : vector<8x1xf32>
    %220 = vector.broadcast %219 : vector<8x1xf32> to vector<8x32xf32>
    %221 = arith.mulf %216, %220 : vector<8x32xf32>
    %222 = vector.shape_cast %201 : vector<32xf32> to vector<1x32xf32>
    %223 = vector.broadcast %222 : vector<1x32xf32> to vector<8x32xf32>
    %224 = arith.mulf %221, %223 : vector<8x32xf32>
    %225 = vector.shape_cast %203 : vector<32xf32> to vector<1x32xf32>
    %226 = vector.broadcast %225 : vector<1x32xf32> to vector<8x32xf32>
    %227 = arith.addf %224, %226 : vector<8x32xf32>
    %cst_114 = arith.constant 0.000000e+00 : f32
    %228 = vector.broadcast %cst_114 : f32 to vector<8x32xf32>
    %c0_115 = arith.constant 0 : index
    %c0_116 = arith.constant 0 : index
    %c0_117 = arith.constant 0 : index
    %229 = vector.load %arg6[%c0_115, %c0_116, %c0_117] : memref<2x32x16xf32, #tpu.memory_space<vmem>>, vector<1x32x16xf32>
    %230 = vector.shape_cast %229 : vector<1x32x16xf32> to vector<32x16xf32>
    %cst_118 = arith.constant dense<0.000000e+00> : vector<8x16xf32>
    %231 = tpu.matmul %227, %230, %cst_118 {dimension_numbers = #tpu.dot_dimension_numbers<[1], [0], [0], [1], [0, 0, 1, 1], [], []>} : vector<8x32xf32>, vector<32x16xf32>, vector<8x16xf32> -> vector<8x16xf32>
    %c0_119 = arith.constant 0 : index
    %c0_120 = arith.constant 0 : index
    %c0_121 = arith.constant 0 : index
    %232 = vector.load %arg9[%c0_119, %c0_120, %c0_121] : memref<2x1x16xf32, #tpu.memory_space<vmem>>, vector<1x1x16xf32>
    %233 = vector.shape_cast %232 : vector<1x1x16xf32> to vector<1x16xf32>
    %234 = vector.broadcast %233 : vector<1x16xf32> to vector<8x16xf32>
    %235 = arith.addf %231, %234 : vector<8x16xf32>
    %c0_122 = arith.constant 0 : index
    %c0_123 = arith.constant 0 : index
    %c0_124 = arith.constant 0 : index
    %236 = vector.load %arg7[%c0_122, %c0_123, %c0_124] : memref<2x32x16xf32, #tpu.memory_space<vmem>>, vector<1x32x16xf32>
    %237 = vector.shape_cast %236 : vector<1x32x16xf32> to vector<32x16xf32>
    %cst_125 = arith.constant dense<0.000000e+00> : vector<8x16xf32>
    %238 = tpu.matmul %227, %237, %cst_125 {dimension_numbers = #tpu.dot_dimension_numbers<[1], [0], [0], [1], [0, 0, 1, 1], [], []>} : vector<8x32xf32>, vector<32x16xf32>, vector<8x16xf32> -> vector<8x16xf32>
    %c0_126 = arith.constant 0 : index
    %c0_127 = arith.constant 0 : index
    %c0_128 = arith.constant 0 : index
    %239 = vector.load %arg10[%c0_126, %c0_127, %c0_128] : memref<2x1x16xf32, #tpu.memory_space<vmem>>, vector<1x1x16xf32>
    %240 = vector.shape_cast %239 : vector<1x1x16xf32> to vector<1x16xf32>
    %241 = vector.broadcast %240 : vector<1x16xf32> to vector<8x16xf32>
    %242 = arith.addf %238, %241 : vector<8x16xf32>
    %c0_129 = arith.constant 0 : index
    %c0_130 = arith.constant 0 : index
    %c0_131 = arith.constant 0 : index
    %243 = vector.load %arg8[%c0_129, %c0_130, %c0_131] : memref<2x32x16xf32, #tpu.memory_space<vmem>>, vector<1x32x16xf32>
    %244 = vector.shape_cast %243 : vector<1x32x16xf32> to vector<32x16xf32>
    %cst_132 = arith.constant dense<0.000000e+00> : vector<8x16xf32>
    %245 = tpu.matmul %227, %244, %cst_132 {dimension_numbers = #tpu.dot_dimension_numbers<[1], [0], [0], [1], [0, 0, 1, 1], [], []>} : vector<8x32xf32>, vector<32x16xf32>, vector<8x16xf32> -> vector<8x16xf32>
    %c0_133 = arith.constant 0 : index
    %c0_134 = arith.constant 0 : index
    %c0_135 = arith.constant 0 : index
    %246 = vector.load %arg11[%c0_133, %c0_134, %c0_135] : memref<2x1x16xf32, #tpu.memory_space<vmem>>, vector<1x1x16xf32>
    %247 = vector.shape_cast %246 : vector<1x1x16xf32> to vector<1x16xf32>
    %248 = vector.broadcast %247 : vector<1x16xf32> to vector<8x16xf32>
    %249 = arith.addf %245, %248 : vector<8x16xf32>
    %250 = tpu.transpose %242, [1, 0] : vector<8x16xf32> -> vector<16x8xf32>
    %cst_136 = arith.constant dense<0.000000e+00> : vector<8x8xf32>
    %251 = tpu.matmul %235, %250, %cst_136 {dimension_numbers = #tpu.dot_dimension_numbers<[1], [0], [0], [1], [0, 0, 1, 1], [], []>} : vector<8x16xf32>, vector<16x8xf32>, vector<8x8xf32> -> vector<8x8xf32>
    %252 = vector.broadcast %199 : vector<1x8xf32> to vector<8x8xf32>
    %253 = arith.addf %251, %252 : vector<8x8xf32>
    %cst_137 = arith.constant dense<0xFF800000> : vector<8xf32>
    %254 = vector.multi_reduction <maximumf>, %253, %cst_137 [1] : vector<8x8xf32> to vector<8xf32>
    %255 = vector.shape_cast %254 : vector<8xf32> to vector<8x1xf32>
    %256 = vector.broadcast %255 : vector<8x1xf32> to vector<8x8xf32>
    %257 = arith.subf %253, %256 : vector<8x8xf32>
    %258 = math.exp %257 : vector<8x8xf32>
    %cst_138 = arith.constant dense<0.000000e+00> : vector<8xf32>
    %259 = vector.multi_reduction <add>, %258, %cst_138 [1] : vector<8x8xf32> to vector<8xf32>
    %260 = vector.shape_cast %259 : vector<8xf32> to vector<8x1xf32>
    %261 = tpu.reciprocal %260 {approx = true} : vector<8x1xf32> -> vector<8x1xf32>
    %262 = vector.broadcast %261 : vector<8x1xf32> to vector<8x8xf32>
    %263 = arith.mulf %258, %262 : vector<8x8xf32>
    %cst_139 = arith.constant dense<0.000000e+00> : vector<8x16xf32>
    %264 = tpu.matmul %263, %249, %cst_139 {dimension_numbers = #tpu.dot_dimension_numbers<[1], [0], [0], [1], [0, 0, 1, 1], [], []>} : vector<8x8xf32>, vector<8x16xf32>, vector<8x16xf32> -> vector<8x16xf32>
    %c0_140 = arith.constant 0 : index
    %c0_141 = arith.constant 0 : index
    %c0_142 = arith.constant 0 : index
    %265 = vector.load %arg12[%c0_140, %c0_141, %c0_142] : memref<2x16x32xf32, #tpu.memory_space<vmem>>, vector<1x16x32xf32>
    %266 = vector.shape_cast %265 : vector<1x16x32xf32> to vector<16x32xf32>
    %cst_143 = arith.constant dense<0.000000e+00> : vector<8x32xf32>
    %267 = tpu.matmul %264, %266, %cst_143 {dimension_numbers = #tpu.dot_dimension_numbers<[1], [0], [0], [1], [0, 0, 1, 1], [], []>} : vector<8x16xf32>, vector<16x32xf32>, vector<8x32xf32> -> vector<8x32xf32>
    %268 = arith.addf %228, %267 : vector<8x32xf32>
    %c1_144 = arith.constant 1 : index
    %c0_145 = arith.constant 0 : index
    %c0_146 = arith.constant 0 : index
    %269 = vector.load %arg6[%c1_144, %c0_145, %c0_146] : memref<2x32x16xf32, #tpu.memory_space<vmem>>, vector<1x32x16xf32>
    %270 = vector.shape_cast %269 : vector<1x32x16xf32> to vector<32x16xf32>
    %cst_147 = arith.constant dense<0.000000e+00> : vector<8x16xf32>
    %271 = tpu.matmul %227, %270, %cst_147 {dimension_numbers = #tpu.dot_dimension_numbers<[1], [0], [0], [1], [0, 0, 1, 1], [], []>} : vector<8x32xf32>, vector<32x16xf32>, vector<8x16xf32> -> vector<8x16xf32>
    %c1_148 = arith.constant 1 : index
    %c0_149 = arith.constant 0 : index
    %c0_150 = arith.constant 0 : index
    %272 = vector.load %arg9[%c1_148, %c0_149, %c0_150] : memref<2x1x16xf32, #tpu.memory_space<vmem>>, vector<1x1x16xf32>
    %273 = vector.shape_cast %272 : vector<1x1x16xf32> to vector<1x16xf32>
    %274 = vector.broadcast %273 : vector<1x16xf32> to vector<8x16xf32>
    %275 = arith.addf %271, %274 : vector<8x16xf32>
    %c1_151 = arith.constant 1 : index
    %c0_152 = arith.constant 0 : index
    %c0_153 = arith.constant 0 : index
    %276 = vector.load %arg7[%c1_151, %c0_152, %c0_153] : memref<2x32x16xf32, #tpu.memory_space<vmem>>, vector<1x32x16xf32>
    %277 = vector.shape_cast %276 : vector<1x32x16xf32> to vector<32x16xf32>
    %cst_154 = arith.constant dense<0.000000e+00> : vector<8x16xf32>
    %278 = tpu.matmul %227, %277, %cst_154 {dimension_numbers = #tpu.dot_dimension_numbers<[1], [0], [0], [1], [0, 0, 1, 1], [], []>} : vector<8x32xf32>, vector<32x16xf32>, vector<8x16xf32> -> vector<8x16xf32>
    %c1_155 = arith.constant 1 : index
    %c0_156 = arith.constant 0 : index
    %c0_157 = arith.constant 0 : index
    %279 = vector.load %arg10[%c1_155, %c0_156, %c0_157] : memref<2x1x16xf32, #tpu.memory_space<vmem>>, vector<1x1x16xf32>
    %280 = vector.shape_cast %279 : vector<1x1x16xf32> to vector<1x16xf32>
    %281 = vector.broadcast %280 : vector<1x16xf32> to vector<8x16xf32>
    %282 = arith.addf %278, %281 : vector<8x16xf32>
    %c1_158 = arith.constant 1 : index
    %c0_159 = arith.constant 0 : index
    %c0_160 = arith.constant 0 : index
    %283 = vector.load %arg8[%c1_158, %c0_159, %c0_160] : memref<2x32x16xf32, #tpu.memory_space<vmem>>, vector<1x32x16xf32>
    %284 = vector.shape_cast %283 : vector<1x32x16xf32> to vector<32x16xf32>
    %cst_161 = arith.constant dense<0.000000e+00> : vector<8x16xf32>
    %285 = tpu.matmul %227, %284, %cst_161 {dimension_numbers = #tpu.dot_dimension_numbers<[1], [0], [0], [1], [0, 0, 1, 1], [], []>} : vector<8x32xf32>, vector<32x16xf32>, vector<8x16xf32> -> vector<8x16xf32>
    %c1_162 = arith.constant 1 : index
    %c0_163 = arith.constant 0 : index
    %c0_164 = arith.constant 0 : index
    %286 = vector.load %arg11[%c1_162, %c0_163, %c0_164] : memref<2x1x16xf32, #tpu.memory_space<vmem>>, vector<1x1x16xf32>
    %287 = vector.shape_cast %286 : vector<1x1x16xf32> to vector<1x16xf32>
    %288 = vector.broadcast %287 : vector<1x16xf32> to vector<8x16xf32>
    %289 = arith.addf %285, %288 : vector<8x16xf32>
    %290 = tpu.transpose %282, [1, 0] : vector<8x16xf32> -> vector<16x8xf32>
    %cst_165 = arith.constant dense<0.000000e+00> : vector<8x8xf32>
    %291 = tpu.matmul %275, %290, %cst_165 {dimension_numbers = #tpu.dot_dimension_numbers<[1], [0], [0], [1], [0, 0, 1, 1], [], []>} : vector<8x16xf32>, vector<16x8xf32>, vector<8x8xf32> -> vector<8x8xf32>
    %292 = vector.broadcast %199 : vector<1x8xf32> to vector<8x8xf32>
    %293 = arith.addf %291, %292 : vector<8x8xf32>
    %cst_166 = arith.constant dense<0xFF800000> : vector<8xf32>
    %294 = vector.multi_reduction <maximumf>, %293, %cst_166 [1] : vector<8x8xf32> to vector<8xf32>
    %295 = vector.shape_cast %294 : vector<8xf32> to vector<8x1xf32>
    %296 = vector.broadcast %295 : vector<8x1xf32> to vector<8x8xf32>
    %297 = arith.subf %293, %296 : vector<8x8xf32>
    %298 = math.exp %297 : vector<8x8xf32>
    %cst_167 = arith.constant dense<0.000000e+00> : vector<8xf32>
    %299 = vector.multi_reduction <add>, %298, %cst_167 [1] : vector<8x8xf32> to vector<8xf32>
    %300 = vector.shape_cast %299 : vector<8xf32> to vector<8x1xf32>
    %301 = tpu.reciprocal %300 {approx = true} : vector<8x1xf32> -> vector<8x1xf32>
    %302 = vector.broadcast %301 : vector<8x1xf32> to vector<8x8xf32>
    %303 = arith.mulf %298, %302 : vector<8x8xf32>
    %cst_168 = arith.constant dense<0.000000e+00> : vector<8x16xf32>
    %304 = tpu.matmul %303, %289, %cst_168 {dimension_numbers = #tpu.dot_dimension_numbers<[1], [0], [0], [1], [0, 0, 1, 1], [], []>} : vector<8x8xf32>, vector<8x16xf32>, vector<8x16xf32> -> vector<8x16xf32>
    %c1_169 = arith.constant 1 : index
    %c0_170 = arith.constant 0 : index
    %c0_171 = arith.constant 0 : index
    %305 = vector.load %arg12[%c1_169, %c0_170, %c0_171] : memref<2x16x32xf32, #tpu.memory_space<vmem>>, vector<1x16x32xf32>
    %306 = vector.shape_cast %305 : vector<1x16x32xf32> to vector<16x32xf32>
    %cst_172 = arith.constant dense<0.000000e+00> : vector<8x32xf32>
    %307 = tpu.matmul %304, %306, %cst_172 {dimension_numbers = #tpu.dot_dimension_numbers<[1], [0], [0], [1], [0, 0, 1, 1], [], []>} : vector<8x16xf32>, vector<16x32xf32>, vector<8x32xf32> -> vector<8x32xf32>
    %308 = arith.addf %268, %307 : vector<8x32xf32>
    %309 = arith.addf %193, %308 : vector<8x32xf32>
    %310 = vector.broadcast %7 : vector<1x32xf32> to vector<8x32xf32>
    %311 = arith.addf %309, %310 : vector<8x32xf32>
    %312 = vector.extract_strided_slice %2 {offsets = [2, 0], sizes = [1, 32], strides = [1, 1]} : vector<4x32xf32> to vector<1x32xf32>
    %313 = vector.shape_cast %312 : vector<1x32xf32> to vector<32xf32>
    %314 = vector.extract_strided_slice %2 {offsets = [3, 0], sizes = [1, 32], strides = [1, 1]} : vector<4x32xf32> to vector<1x32xf32>
    %315 = vector.shape_cast %314 : vector<1x32xf32> to vector<32xf32>
    %cst_173 = arith.constant dense<0.000000e+00> : vector<8xf32>
    %316 = vector.multi_reduction <add>, %311, %cst_173 [1] : vector<8x32xf32> to vector<8xf32>
    %317 = vector.shape_cast %316 : vector<8xf32> to vector<8x1xf32>
    %cst_174 = arith.constant 3.200000e+01 : f32
    %318 = vector.broadcast %cst_174 : f32 to vector<8x1xf32>
    %319 = arith.divf %317, %318 : vector<8x1xf32>
    %320 = vector.broadcast %319 : vector<8x1xf32> to vector<8x32xf32>
    %321 = arith.subf %311, %320 : vector<8x32xf32>
    %322 = arith.mulf %321, %321 : vector<8x32xf32>
    %cst_175 = arith.constant dense<0.000000e+00> : vector<8xf32>
    %323 = vector.multi_reduction <add>, %322, %cst_175 [1] : vector<8x32xf32> to vector<8xf32>
    %324 = vector.shape_cast %323 : vector<8xf32> to vector<8x1xf32>
    %cst_176 = arith.constant 3.200000e+01 : f32
    %325 = vector.broadcast %cst_176 : f32 to vector<8x1xf32>
    %326 = arith.divf %324, %325 : vector<8x1xf32>
    %327 = vector.broadcast %319 : vector<8x1xf32> to vector<8x32xf32>
    %328 = arith.subf %311, %327 : vector<8x32xf32>
    %cst_177 = arith.constant 9.99999974E-6 : f32
    %329 = vector.broadcast %cst_177 : f32 to vector<8x1xf32>
    %330 = arith.addf %326, %329 : vector<8x1xf32>
    %331 = math.rsqrt %330 : vector<8x1xf32>
    %332 = vector.broadcast %331 : vector<8x1xf32> to vector<8x32xf32>
    %333 = arith.mulf %328, %332 : vector<8x32xf32>
    %334 = vector.shape_cast %313 : vector<32xf32> to vector<1x32xf32>
    %335 = vector.broadcast %334 : vector<1x32xf32> to vector<8x32xf32>
    %336 = arith.mulf %333, %335 : vector<8x32xf32>
    %337 = vector.shape_cast %315 : vector<32xf32> to vector<1x32xf32>
    %338 = vector.broadcast %337 : vector<1x32xf32> to vector<8x32xf32>
    %339 = arith.addf %336, %338 : vector<8x32xf32>
    %cst_178 = arith.constant dense<0.000000e+00> : vector<8x64xf32>
    %340 = tpu.matmul %339, %3, %cst_178 {dimension_numbers = #tpu.dot_dimension_numbers<[1], [0], [0], [1], [0, 0, 1, 1], [], []>} : vector<8x32xf32>, vector<32x64xf32>, vector<8x64xf32> -> vector<8x64xf32>
    %341 = vector.broadcast %4 : vector<1x64xf32> to vector<8x64xf32>
    %342 = arith.addf %340, %341 : vector<8x64xf32>
    %343 = arith.mulf %342, %342 : vector<8x64xf32>
    %344 = arith.mulf %342, %343 : vector<8x64xf32>
    %cst_179 = arith.constant 4.471500e-02 : f32
    %345 = vector.broadcast %cst_179 : f32 to vector<8x64xf32>
    %346 = arith.mulf %345, %344 : vector<8x64xf32>
    %347 = arith.addf %342, %346 : vector<8x64xf32>
    %cst_180 = arith.constant 0.797884583 : f32
    %348 = vector.broadcast %cst_180 : f32 to vector<8x64xf32>
    %349 = arith.mulf %348, %347 : vector<8x64xf32>
    %350 = math.tanh %349 : vector<8x64xf32>
    %cst_181 = arith.constant 1.000000e+00 : f32
    %351 = vector.broadcast %cst_181 : f32 to vector<8x64xf32>
    %352 = arith.addf %351, %350 : vector<8x64xf32>
    %cst_182 = arith.constant 5.000000e-01 : f32
    %353 = vector.broadcast %cst_182 : f32 to vector<8x64xf32>
    %354 = arith.mulf %353, %352 : vector<8x64xf32>
    %355 = arith.mulf %342, %354 : vector<8x64xf32>
    %cst_183 = arith.constant dense<0.000000e+00> : vector<8x32xf32>
    %356 = tpu.matmul %355, %5, %cst_183 {dimension_numbers = #tpu.dot_dimension_numbers<[1], [0], [0], [1], [0, 0, 1, 1], [], []>} : vector<8x64xf32>, vector<64x32xf32>, vector<8x32xf32> -> vector<8x32xf32>
    %357 = vector.broadcast %6 : vector<1x32xf32> to vector<8x32xf32>
    %358 = arith.addf %356, %357 : vector<8x32xf32>
    %359 = arith.addf %311, %358 : vector<8x32xf32>
    %c1_184 = arith.constant 1 : index
    %c0_185 = arith.constant 0 : index
    %c0_186 = arith.constant 0 : index
    %360 = vector.load %arg18[%c1_184, %c0_185, %c0_186] : memref<2x8x32xf32, #tpu.memory_space<vmem>>, vector<1x8x32xf32>
    %361 = vector.shape_cast %360 : vector<1x8x32xf32> to vector<8x32xf32>
    %362 = vector.shape_cast %359 : vector<8x32xf32> to vector<1x8x32xf32>
    tpu.vector_store %arg18[%c1_184, %c0_185, %c0_186], %362 {strides = array<i32>} : memref<2x8x32xf32, #tpu.memory_space<vmem>>, vector<1x8x32xf32>,
    return
  }
  func.func @transform_0(%arg0: i32) -> (i32, i32, i32) {
    %c0_i32 = arith.constant 0 : i32
    %c0_i32_0 = arith.constant 0 : i32
    %c0_i32_1 = arith.constant 0 : i32
    %c0_i32_2 = arith.constant 0 : i32
    return %c0_i32, %c0_i32_0, %c0_i32_1 : i32, i32, i32
  }
  func.func @transform_1(%arg0: i32) -> (i32, i32, i32) {
    %c0_i32 = arith.constant 0 : i32
    %c0_i32_0 = arith.constant 0 : i32
    %c0_i32_1 = arith.constant 0 : i32
    %c0_i32_2 = arith.constant 0 : i32
    return %c0_i32, %c0_i32_0, %c0_i32_1 : i32, i32, i32
  }
  func.func @transform_2(%arg0: i32) -> (i32, i32) {
    %c0_i32 = arith.constant 0 : i32
    %c0_i32_0 = arith.constant 0 : i32
    %c0_i32_1 = arith.constant 0 : i32
    return %c0_i32, %c0_i32_0 : i32, i32
  }
  func.func @transform_3(%arg0: i32) -> (i32, i32) {
    %c0_i32 = arith.constant 0 : i32
    %c0_i32_0 = arith.constant 0 : i32
    %c0_i32_1 = arith.constant 0 : i32
    return %c0_i32, %c0_i32_0 : i32, i32
  }
  func.func @transform_4(%arg0: i32) -> (i32, i32) {
    %c0_i32 = arith.constant 0 : i32
    %c0_i32_0 = arith.constant 0 : i32
    %c0_i32_1 = arith.constant 0 : i32
    return %c0_i32, %c0_i32_0 : i32, i32
  }
  func.func @transform_5(%arg0: i32) -> (i32, i32, i32) {
    %c0_i32 = arith.constant 0 : i32
    %c0_i32_0 = arith.constant 0 : i32
    %c0_i32_1 = arith.constant 0 : i32
    %c0_i32_2 = arith.constant 0 : i32
    return %c0_i32, %c0_i32_0, %c0_i32_1 : i32, i32, i32
  }
  func.func @transform_6(%arg0: i32) -> (i32, i32, i32) {
    %c0_i32 = arith.constant 0 : i32
    %c0_i32_0 = arith.constant 0 : i32
    %c0_i32_1 = arith.constant 0 : i32
    %c0_i32_2 = arith.constant 0 : i32
    return %c0_i32, %c0_i32_0, %c0_i32_1 : i32, i32, i32
  }
  func.func @transform_7(%arg0: i32) -> (i32, i32, i32) {
    %c0_i32 = arith.constant 0 : i32
    %c0_i32_0 = arith.constant 0 : i32
    %c0_i32_1 = arith.constant 0 : i32
    %c0_i32_2 = arith.constant 0 : i32
    return %c0_i32, %c0_i32_0, %c0_i32_1 : i32, i32, i32
  }
  func.func @transform_8(%arg0: i32) -> (i32, i32, i32) {
    %c0_i32 = arith.constant 0 : i32
    %c0_i32_0 = arith.constant 0 : i32
    %c0_i32_1 = arith.constant 0 : i32
    %c0_i32_2 = arith.constant 0 : i32
    return %c0_i32, %c0_i32_0, %c0_i32_1 : i32, i32, i32
  }
  func.func @transform_9(%arg0: i32) -> (i32, i32, i32) {
    %c0_i32 = arith.constant 0 : i32
    %c0_i32_0 = arith.constant 0 : i32
    %c0_i32_1 = arith.constant 0 : i32
    %c0_i32_2 = arith.constant 0 : i32
    return %c0_i32, %c0_i32_0, %c0_i32_1 : i32, i32, i32
  }
  func.func @transform_10(%arg0: i32) -> (i32, i32, i32) {
    %c0_i32 = arith.constant 0 : i32
    %c0_i32_0 = arith.constant 0 : i32
    %c0_i32_1 = arith.constant 0 : i32
    %c0_i32_2 = arith.constant 0 : i32
    return %c0_i32, %c0_i32_0, %c0_i32_1 : i32, i32, i32
  }
  func.func @transform_11(%arg0: i32) -> (i32, i32, i32) {
    %c0_i32 = arith.constant 0 : i32
    %c0_i32_0 = arith.constant 0 : i32
    %c0_i32_1 = arith.constant 0 : i32
    %c0_i32_2 = arith.constant 0 : i32
    return %c0_i32, %c0_i32_0, %c0_i32_1 : i32, i32, i32
  }
  func.func @transform_12(%arg0: i32) -> (i32, i32) {
    %c0_i32 = arith.constant 0 : i32
    %c0_i32_0 = arith.constant 0 : i32
    %c0_i32_1 = arith.constant 0 : i32
    return %c0_i32, %c0_i32_0 : i32, i32
  }
  func.func @transform_13(%arg0: i32) -> (i32, i32) {
    %c0_i32 = arith.constant 0 : i32
    %c0_i32_0 = arith.constant 0 : i32
    %c0_i32_1 = arith.constant 0 : i32
    return %c0_i32, %c0_i32_0 : i32, i32
  }
  func.func @transform_14(%arg0: i32) -> (i32, i32) {
    %c0_i32 = arith.constant 0 : i32
    %c0_i32_0 = arith.constant 0 : i32
    %c0_i32_1 = arith.constant 0 : i32
    return %c0_i32, %c0_i32_0 : i32, i32
  }
  func.func @transform_15(%arg0: i32) -> (i32, i32) {
    %c0_i32 = arith.constant 0 : i32
    %c0_i32_0 = arith.constant 0 : i32
    %c0_i32_1 = arith.constant 0 : i32
    return %c0_i32, %c0_i32_0 : i32, i32
  }
  func.func @transform_16(%arg0: i32) -> (i32, i32) {
    %c0_i32 = arith.constant 0 : i32
    %c0_i32_0 = arith.constant 0 : i32
    %c0_i32_1 = arith.constant 0 : i32
    return %c0_i32, %c0_i32_0 : i32, i32
  }
  func.func @transform_17(%arg0: i32) -> (i32, i32, i32) {
    %c0_i32 = arith.constant 0 : i32
    %c0_i32_0 = arith.constant 0 : i32
    %c0_i32_1 = arith.constant 0 : i32
    %c0_i32_2 = arith.constant 0 : i32
    return %c0_i32, %c0_i32_0, %c0_i32_1 : i32, i32, i32
  }
}

</mosaic_0001>

<llo_original>
// kernel: tpu_custom_call.1
$region0: #{tpu_custom_call.1}
  #allocation0 [shape = 'u32[]', space=smem, size = 0x4, offset = 0x4, fixed_abs, tag = 'smem constant byte address 0x4 - core index']
  #allocation1 [shape = 'u32[72,128]{1,0:T(1,128)}', space=vmem, size = 0x9000, scoped, tag = 'internal scratch']
  %s0 = inlined_call_operand.vmem [shape: s32[2,8,1], index: 0, kind: input, shape index: {}]
  %s1 = inlined_call_operand.vmem [shape: f32[2,1,8], index: 1, kind: input, shape index: {}]
  %s2 = inlined_call_operand.vmem [shape: f32[64,32], index: 2, kind: input, shape index: {}]
  %s3 = inlined_call_operand.vmem [shape: f32[8,32], index: 3, kind: input, shape index: {}]
  %s4 = inlined_call_operand.vmem [shape: f32[4,32], index: 4, kind: input, shape index: {}]
  %s5 = inlined_call_operand.vmem [shape: f32[2,32,16], index: 5, kind: input, shape index: {}]
  %s6 = inlined_call_operand.vmem [shape: f32[2,32,16], index: 6, kind: input, shape index: {}]
  %s7 = inlined_call_operand.vmem [shape: f32[2,32,16], index: 7, kind: input, shape index: {}]
  %s8 = inlined_call_operand.vmem [shape: f32[2,1,16], index: 8, kind: input, shape index: {}]
  %s9 = inlined_call_operand.vmem [shape: f32[2,1,16], index: 9, kind: input, shape index: {}]
  %s10 = inlined_call_operand.vmem [shape: f32[2,1,16], index: 10, kind: input, shape index: {}]
  %s11 = inlined_call_operand.vmem [shape: f32[2,16,32], index: 11, kind: input, shape index: {}]
  %s12 = inlined_call_operand.vmem [shape: f32[1,32], index: 12, kind: input, shape index: {}]
  %s13 = inlined_call_operand.vmem [shape: f32[32,64], index: 13, kind: input, shape index: {}]
  %s14 = inlined_call_operand.vmem [shape: f32[1,64], index: 14, kind: input, shape index: {}]
  %s15 = inlined_call_operand.vmem [shape: f32[64,32], index: 15, kind: input, shape index: {}]
  %s16 = inlined_call_operand.vmem [shape: f32[1,32], index: 16, kind: input, shape index: {}]
  %s17 = inlined_call_operand.hbm [shape: f32[2,8,32], index: 17, kind: output, shape index: {}]
  %s18 = sld [smem:[#allocation0]]
  $region78: #{tpu_custom_call.1} parent=0
    _
  %s20 = ssub.s32 1, %s18
  %s21 = scalar_select 0, %s20, %s18
  $region1: #{tpu_custom_call.1} parent=0
    #allocation2 [shape = 'u8[8192]{0}', space=vmem, size = 0x2000, scoped, tag = 'output window, operand 0, single buffered']
    #allocation3 [shape = 's32[1]{0}', space=sflag, size = 0x4, scoped, tag = 'scoped memory for tpu_custom_call.1']
    %22 = vsyncpa [#allocation3], 0
    // Predicated region
    $region2: #{tpu_custom_call.1} parent=1 // pred_check
      _
    $region3: #{tpu_custom_call.1} parent=1 // pred_check_branch
      %24 = sbr.rel (0) target = $region5
    $region4: #{tpu_custom_call.1} parent=1 // pred_region
      _
    $region5: #{tpu_custom_call.1} parent=1 // pred_fallthru
      _
    // Predicated region
    $region6: #{tpu_custom_call.1} parent=1 // pred_check
      _
    $region7: #{tpu_custom_call.1} parent=1 // pred_check_branch
      %26 = sbr.rel (0) target = $region9
    $region8: #{tpu_custom_call.1} parent=1 // pred_region
      _
    $region9: #{tpu_custom_call.1} parent=1 // pred_fallthru
      _
    // Predicated region
    $region10: #{tpu_custom_call.1} parent=1 // pred_check
      _
    $region11: #{tpu_custom_call.1} parent=1 // pred_check_branch
      %28 = sbr.rel (0) target = $region13
    $region12: #{tpu_custom_call.1} parent=1 // pred_region
      _
    $region13: #{tpu_custom_call.1} parent=1 // pred_fallthru
      _
    // Predicated region
    $region14: #{tpu_custom_call.1} parent=1 // pred_check
      _
    $region15: #{tpu_custom_call.1} parent=1 // pred_check_branch
      %30 = sbr.rel (0) target = $region17
    $region16: #{tpu_custom_call.1} parent=1 // pred_region
      _
    $region17: #{tpu_custom_call.1} parent=1 // pred_fallthru
      _
    // Predicated region
    $region18: #{tpu_custom_call.1} parent=1 // pred_check
      _
    $region19: #{tpu_custom_call.1} parent=1 // pred_check_branch
      %32 = sbr.rel (0) target = $region21
    $region20: #{tpu_custom_call.1} parent=1 // pred_region
      _
    $region21: #{tpu_custom_call.1} parent=1 // pred_fallthru
      _
    // Predicated region
    $region22: #{tpu_custom_call.1} parent=1 // pred_check
      _
    $region23: #{tpu_custom_call.1} parent=1 // pred_check_branch
      %34 = sbr.rel (0) target = $region25
    $region24: #{tpu_custom_call.1} parent=1 // pred_region
      _
    $region25: #{tpu_custom_call.1} parent=1 // pred_fallthru
      _
    // Predicated region
    $region26: #{tpu_custom_call.1} parent=1 // pred_check
      _
    $region27: #{tpu_custom_call.1} parent=1 // pred_check_branch
      %36 = sbr.rel (0) target = $region29
    $region28: #{tpu_custom_call.1} parent=1 // pred_region
      _
    $region29: #{tpu_custom_call.1} parent=1 // pred_fallthru
      _
    // Predicated region
    $region30: #{tpu_custom_call.1} parent=1 // pred_check
      _
    $region31: #{tpu_custom_call.1} parent=1 // pred_check_branch
      %38 = sbr.rel (0) target = $region33
    $region32: #{tpu_custom_call.1} parent=1 // pred_region
      _
    $region33: #{tpu_custom_call.1} parent=1 // pred_fallthru
      _
    // Predicated region
    $region34: #{tpu_custom_call.1} parent=1 // pred_check
      _
    $region35: #{tpu_custom_call.1} parent=1 // pred_check_branch
      %40 = sbr.rel (0) target = $region37
    $region36: #{tpu_custom_call.1} parent=1 // pred_region
      _
    $region37: #{tpu_custom_call.1} parent=1 // pred_fallthru
      _
    // Predicated region
    $region38: #{tpu_custom_call.1} parent=1 // pred_check
      _
    $region39: #{tpu_custom_call.1} parent=1 // pred_check_branch
      %42 = sbr.rel (0) target = $region41
    $region40: #{tpu_custom_call.1} parent=1 // pred_region
      _
    $region41: #{tpu_custom_call.1} parent=1 // pred_fallthru
      _
    // Predicated region
    $region42: #{tpu_custom_call.1} parent=1 // pred_check
      _
    $region43: #{tpu_custom_call.1} parent=1 // pred_check_branch
      %44 = sbr.rel (0) target = $region45
    $region44: #{tpu_custom_call.1} parent=1 // pred_region
      _
    $region45: #{tpu_custom_call.1} parent=1 // pred_fallthru
      _
    // Predicated region
    $region46: #{tpu_custom_call.1} parent=1 // pred_check
      _
    $region47: #{tpu_custom_call.1} parent=1 // pred_check_branch
      %46 = sbr.rel (0) target = $region49
    $region48: #{tpu_custom_call.1} parent=1 // pred_region
      _
    $region49: #{tpu_custom_call.1} parent=1 // pred_fallthru
      _
    // Predicated region
    $region50: #{tpu_custom_call.1} parent=1 // pred_check
      _
    $region51: #{tpu_custom_call.1} parent=1 // pred_check_branch
      %48 = sbr.rel (0) target = $region53
    $region52: #{tpu_custom_call.1} parent=1 // pred_region
      _
    $region53: #{tpu_custom_call.1} parent=1 // pred_fallthru
      _
    // Predicated region
    $region54: #{tpu_custom_call.1} parent=1 // pred_check
      _
    $region55: #{tpu_custom_call.1} parent=1 // pred_check_branch
      %50 = sbr.rel (0) target = $region57
    $region56: #{tpu_custom_call.1} parent=1 // pred_region
      _
    $region57: #{tpu_custom_call.1} parent=1 // pred_fallthru
      _
    // Predicated region
    $region58: #{tpu_custom_call.1} parent=1 // pred_check
      _
    $region59: #{tpu_custom_call.1} parent=1 // pred_check_branch
      %52 = sbr.rel (0) target = $region61
    $region60: #{tpu_custom_call.1} parent=1 // pred_region
      _
    $region61: #{tpu_custom_call.1} parent=1 // pred_fallthru
      _
    // Predicated region
    $region62: #{tpu_custom_call.1} parent=1 // pred_check
      _
    $region63: #{tpu_custom_call.1} parent=1 // pred_check_branch
      %54 = sbr.rel (0) target = $region65
    $region64: #{tpu_custom_call.1} parent=1 // pred_region
      _
    $region65: #{tpu_custom_call.1} parent=1 // pred_fallthru
      _
    // Predicated region
    $region66: #{tpu_custom_call.1} parent=1 // pred_check
      _
    $region67: #{tpu_custom_call.1} parent=1 // pred_check_branch
      %56 = sbr.rel (0) target = $region69
    $region68: #{tpu_custom_call.1} parent=1 // pred_region
      _
    $region69: #{tpu_custom_call.1} parent=1 // pred_fallthru
      _
    %v57 = vld [vmem:[%s2] sm:$0xff]
    %v58 = vld [vmem:[%s2 + $0x8] sm:$0xff]
    %v59 = vld [vmem:[%s2 + $0x10] sm:$0xff]
    %v60 = vld [vmem:[%s2 + $0x18] sm:$0xff]
    %v61 = vld [vmem:[%s2 + $0x20] sm:$0xff]
    %v62 = vld [vmem:[%s2 + $0x28] sm:$0xff]
    %v63 = vld [vmem:[%s2 + $0x30] sm:$0xff]
    %v64 = vld [vmem:[%s2 + $0x38] sm:$0xff]
    %v65 = vld [vmem:[%s3] sm:$0xff]
    %v66 = vld [vmem:[%s4] sm:$0xf]
    %v67 = vld [vmem:[%s13] sm:$0xff]
    %v68 = vld [vmem:[%s13 + $0x8] sm:$0xff]
    %v69 = vld [vmem:[%s13 + $0x10] sm:$0xff]
    %v70 = vld [vmem:[%s13 + $0x18] sm:$0xff]
    %v71 = vld [vmem:[%s14] sm:$0x1]
    %v72 = vld [vmem:[%s15] sm:$0xff]
    %v73 = vld [vmem:[%s15 + $0x8] sm:$0xff]
    %v74 = vld [vmem:[%s15 + $0x10] sm:$0xff]
    %v75 = vld [vmem:[%s15 + $0x18] sm:$0xff]
    %v76 = vld [vmem:[%s15 + $0x20] sm:$0xff]
    %v77 = vld [vmem:[%s15 + $0x28] sm:$0xff]
    %v78 = vld [vmem:[%s15 + $0x30] sm:$0xff]
    %v79 = vld [vmem:[%s15 + $0x38] sm:$0xff]
    %v80 = vld [vmem:[%s16] sm:$0x1]
    %v81 = vld [vmem:[%s12] sm:$0x1]
    %v82 = vlaneseq
    %v83 = vand.u32 %v82, 127
    %v84 = vld [vmem:[%s0] sm:$0xff]
    %85 = vset.pattern.permute.xlu0 0
    %86 = vperm.xlu0 %85, %v84
    %v87 = vpop.permute.xlu0 %86
    %vm88 = vcmp.eq.s32.totalorder %v87, %v83
    %v89 = vsel %vm88, 1, 0
    %v90 = vcvt.s32.f32 %v89
    %vm91 = vcmask 523264
    %v93 = vsel %vm91, %v90, 0
    %95 = vmatpush.msra.mxu0 0.0
    %96 = vmatpush.msra.mxu0 0.0
    %97 = vmatpush.msra.mxu0 0.0
    %98 = vmatpush.msra.mxu0 0.0
    %99 = vmatpush.msra.mxu0 0.0
    %100 = vmatpush.msra.mxu0 0.0
    %101 = vmatpush.msra.mxu0 0.0
    %102 = vmatpush.msra.mxu0 0.0
    %103 = vmatpush.msra.mxu0 %v64
    %104 = vmatpush.msra.mxu0 %v63
    %105 = vmatpush.msra.mxu0 %v62
    %106 = vmatpush.msra.mxu0 %v61
    %107 = vmatpush.msra.mxu0 %v60
    %108 = vmatpush.msra.mxu0 %v59
    %109 = vmatpush.msra.mxu0 %v58
    %110 = vmatpush.msra.mxu0 %v57
    %111 = vmatmul.f32.gmra.mxu0 %v93
    %v112 = vpop.f32.mrf.mxu0
    %v113 = vadd.f32 %v65, %v112
    %114 = vdwg.mxu0
    %v115 = vld [vmem:[%s1] sm:$0x1]
    %v116 = vsub.f32 1.0, %v115
    %v117 = vmul.f32 %v116, -1e+09
    %vm118 = vcmask 261120
    %v119 = vsel %vm118, %v113, 0.0
    %120 = vadd.xlane.f32.xlu0 %v119
    %v121 = vpop.xlane.xlu0 %120
    %v122 = vrcp.pop 32.0
    %v123 = vmul.f32 32.0, %v122
    %v124 = vsub.f32 1.0, %v123
    %v125 = vmul.f32 %v122, %v124
    %v126 = vadd.f32 %v122, %v125
    %vm127 = vweird.f32 %v122
    %v128 = vsel %vm127, %v122, %v126
    %v129 = vmul.f32 %v121, %v128
    %v130 = vsub.f32 %v113, %v129
    %v131 = vmul.f32 %v130, %v130
    %v132 = vsel %vm118, %v131, 0.0
    %133 = vadd.xlane.f32.xlu0 %v132
    %v134 = vpop.xlane.xlu0 %133
    %v135 = vmul.f32 %v134, %v128
    %v136 = vadd.f32 %v135, 1e-05
    %v137 = vrsqrt.pop %v136
    %v138 = vmul.f32 %v137, %v136
    %v139 = vmul.f32 %v138, %v137
    %v140 = vmul.f32 0.5, %v139
    %v141 = vsub.f32 1.5, %v140
    %v142 = vmul.f32 %v137, %v141
    %vm143 = vweird.f32 %v136
    %vm144 = vweird.f32 %v137
    %vm145 = vmor %vm143, %vm144
    %v146 = vsel %vm145, %v137, %v142
    %v147 = vmul.f32 %v130, %v146
    %v148 = vperm.slane %v66, 0
    %v149 = vmul.f32 %v147, %v148
    %v150 = vperm.slane %v66, 1
    %v151 = vadd.f32 %v149, %v150
    %v152 = vld [vmem:[%s5] sm:$0xff]
    %v153 = vld [vmem:[%s5 + $0x8] sm:$0xff]
    %v154 = vld [vmem:[%s5 + $0x10] sm:$0xff]
    %v155 = vld [vmem:[%s5 + $0x18] sm:$0xff]
    %v156 = vld [vmem:[%s8] sm:$0x1]
    %v158 = vperm.slane %v156, 0
    %v161 = vsel %vm118, %v151, 0
    %163 = vmatpush.msra.mxu0 0.0
    %164 = vmatpush.msra.mxu0 0.0
    %165 = vmatpush.msra.mxu0 0.0
    %166 = vmatpush.msra.mxu0 0.0
    %167 = vmatpush.msra.mxu0 0.0
    %168 = vmatpush.msra.mxu0 0.0
    %169 = vmatpush.msra.mxu0 0.0
    %170 = vmatpush.msra.mxu0 0.0
    %171 = vmatpush.msra.mxu0 0.0
    %172 = vmatpush.msra.mxu0 0.0
    %173 = vmatpush.msra.mxu0 0.0
    %174 = vmatpush.msra.mxu0 0.0
    %175 = vmatpush.msra.mxu0 %v155
    %176 = vmatpush.msra.mxu0 %v154
    %177 = vmatpush.msra.mxu0 %v153
    %178 = vmatpush.msra.mxu0 %v152
    %179 = vmatmul.f32.gmra.mxu0 %v161
    %v180 = vpop.f32.mrf.mxu0
    %v181 = vadd.f32 %v158, %v180
    %182 = vdwg.mxu0
    %v183 = vld [vmem:[%s6] sm:$0xff]
    %v184 = vld [vmem:[%s6 + $0x8] sm:$0xff]
    %v185 = vld [vmem:[%s6 + $0x10] sm:$0xff]
    %v186 = vld [vmem:[%s6 + $0x18] sm:$0xff]
    %v187 = vld [vmem:[%s9] sm:$0x1]
    %v189 = vperm.slane %v187, 0
    %191 = vmatpush.msra.mxu0 0.0
    %192 = vmatpush.msra.mxu0 0.0
    %193 = vmatpush.msra.mxu0 0.0
    %194 = vmatpush.msra.mxu0 0.0
    %195 = vmatpush.msra.mxu0 0.0
    %196 = vmatpush.msra.mxu0 0.0
    %197 = vmatpush.msra.mxu0 0.0
    %198 = vmatpush.msra.mxu0 0.0
    %199 = vmatpush.msra.mxu0 0.0
    %200 = vmatpush.msra.mxu0 0.0
    %201 = vmatpush.msra.mxu0 0.0
    %202 = vmatpush.msra.mxu0 0.0
    %203 = vmatpush.msra.mxu0 %v186
    %204 = vmatpush.msra.mxu0 %v185
    %205 = vmatpush.msra.mxu0 %v184
    %206 = vmatpush.msra.mxu0 %v183
    %207 = vmatmul.f32.gmra.mxu0 %v161
    %v208 = vpop.f32.mrf.mxu0
    %v209 = vadd.f32 %v189, %v208
    %210 = vdwg.mxu0
    %v211 = vld [vmem:[%s7] sm:$0xff]
    %v212 = vld [vmem:[%s7 + $0x8] sm:$0xff]
    %v213 = vld [vmem:[%s7 + $0x10] sm:$0xff]
    %v214 = vld [vmem:[%s7 + $0x18] sm:$0xff]
    %v215 = vld [vmem:[%s10] sm:$0x1]
    %v217 = vperm.slane %v215, 0
    %219 = vmatpush.msra.mxu0 0.0
    %220 = vmatpush.msra.mxu0 0.0
    %221 = vmatpush.msra.mxu0 0.0
    %222 = vmatpush.msra.mxu0 0.0
    %223 = vmatpush.msra.mxu0 0.0
    %224 = vmatpush.msra.mxu0 0.0
    %225 = vmatpush.msra.mxu0 0.0
    %226 = vmatpush.msra.mxu0 0.0
    %227 = vmatpush.msra.mxu0 0.0
    %228 = vmatpush.msra.mxu0 0.0
    %229 = vmatpush.msra.mxu0 0.0
    %230 = vmatpush.msra.mxu0 0.0
    %231 = vmatpush.msra.mxu0 %v214
    %232 = vmatpush.msra.mxu0 %v213
    %233 = vmatpush.msra.mxu0 %v212
    %234 = vmatpush.msra.mxu0 %v211
    %235 = vmatmul.f32.gmra.mxu0 %v161
    %v236 = vpop.f32.mrf.mxu0
    %v237 = vadd.f32 %v217, %v236
    %238 = vdwg.mxu0
    %v240 = vperm.slane %v117, 0
    %vm242 = vcmask 130048
    %v244 = vsel %vm242, %v181, 0
    %v247 = vsel %vm242, %v209, 0
    %249 = vmatpush.xpose.msra.mxu0 0.0
    %250 = vmatpush.xpose.msra.mxu0 0.0
    %251 = vmatpush.xpose.msra.mxu0 0.0
    %252 = vmatpush.xpose.msra.mxu0 0.0
    %253 = vmatpush.xpose.msra.mxu0 0.0
    %254 = vmatpush.xpose.msra.mxu0 0.0
    %255 = vmatpush.xpose.msra.mxu0 0.0
    %256 = vmatpush.xpose.msra.mxu0 0.0
    %257 = vmatpush.xpose.msra.mxu0 0.0
    %258 = vmatpush.xpose.msra.mxu0 0.0
    %259 = vmatpush.xpose.msra.mxu0 0.0
    %260 = vmatpush.xpose.msra.mxu0 0.0
    %261 = vmatpush.xpose.msra.mxu0 0.0
    %262 = vmatpush.xpose.msra.mxu0 0.0
    %263 = vmatpush.xpose.msra.mxu0 0.0
    %264 = vmatpush.xpose.msra.mxu0 %v247
    %265 = vmatmul.f32.gmra.mxu0 %v244
    %v266 = vpop.f32.mrf.mxu0
    %v267 = vadd.f32 %v240, %v266
    %268 = vdwg.mxu0
    %vm269 = vcmask 64512
    %v270 = vsel %vm269, %v267, -inf
    %271 = vmax.xlane.f32.xlu0 %v270
    %v272 = vpop.xlane.xlu0 %271
    %v273 = vsub.f32 %v267, %v272
    %v274 = vmul.f32 %v273, 1.442695
    %v275 = vpow.pop %v274
    %v276 = vsel %vm269, %v275, 0.0
    %277 = vadd.xlane.f32.xlu0 %v276
    %v278 = vpop.xlane.xlu0 %277
    %v279 = vrcp.pop %v278
    %v280 = vmul.f32 %v275, %v279
    %v282 = vsel %vm269, %v280, 0
    %284 = vmatpush.msra.mxu0 0.0
    %285 = vmatpush.msra.mxu0 0.0
    %286 = vmatpush.msra.mxu0 0.0
    %287 = vmatpush.msra.mxu0 0.0
    %288 = vmatpush.msra.mxu0 0.0
    %289 = vmatpush.msra.mxu0 0.0
    %290 = vmatpush.msra.mxu0 0.0
    %291 = vmatpush.msra.mxu0 0.0
    %292 = vmatpush.msra.mxu0 0.0
    %293 = vmatpush.msra.mxu0 0.0
    %294 = vmatpush.msra.mxu0 0.0
    %295 = vmatpush.msra.mxu0 0.0
    %296 = vmatpush.msra.mxu0 0.0
    %297 = vmatpush.msra.mxu0 0.0
    %298 = vmatpush.msra.mxu0 0.0
    %299 = vmatpush.msra.mxu0 %v237
    %300 = vmatmul.f32.gmra.mxu0 %v282
    %v301 = vpop.f32.mrf.mxu0
    %v302 = vadd.f32 0.0, %v301
    %303 = vdwg.mxu0
    %v304 = vld [vmem:[%s11] sm:$0xff]
    %v305 = vld [vmem:[%s11 + $0x8] sm:$0xff]
    %s306 = scalar_lea.vmem %s5, 32
    %v307 = vld [vmem:[%s306] sm:$0xff]
    %v308 = vld [vmem:[%s306 + $0x8] sm:$0xff]
    %v309 = vld [vmem:[%s306 + $0x10] sm:$0xff]
    %v310 = vld [vmem:[%s306 + $0x18] sm:$0xff]
    %s311 = scalar_lea.vmem %s8, 1
    %v312 = vld [vmem:[%s311] sm:$0x1]
    %v314 = vperm.slane %v312, 0
    %316 = vmatpush.msra.mxu0 0.0
    %317 = vmatpush.msra.mxu0 0.0
    %318 = vmatpush.msra.mxu0 0.0
    %319 = vmatpush.msra.mxu0 0.0
    %320 = vmatpush.msra.mxu0 0.0
    %321 = vmatpush.msra.mxu0 0.0
    %322 = vmatpush.msra.mxu0 0.0
    %323 = vmatpush.msra.mxu0 0.0
    %324 = vmatpush.msra.mxu0 0.0
    %325 = vmatpush.msra.mxu0 0.0
    %326 = vmatpush.msra.mxu0 0.0
    %327 = vmatpush.msra.mxu0 0.0
    %328 = vmatpush.msra.mxu0 %v310
    %329 = vmatpush.msra.mxu0 %v309
    %330 = vmatpush.msra.mxu0 %v308
    %331 = vmatpush.msra.mxu0 %v307
    %332 = vmatmul.f32.gmra.mxu0 %v161
    %v333 = vpop.f32.mrf.mxu0
    %v334 = vadd.f32 %v314, %v333
    %335 = vdwg.mxu0
    %s336 = scalar_lea.vmem %s6, 32
    %v337 = vld [vmem:[%s336] sm:$0xff]
    %v338 = vld [vmem:[%s336 + $0x8] sm:$0xff]
    %v339 = vld [vmem:[%s336 + $0x10] sm:$0xff]
    %v340 = vld [vmem:[%s336 + $0x18] sm:$0xff]
    %s341 = scalar_lea.vmem %s9, 1
    %v342 = vld [vmem:[%s341] sm:$0x1]
    %v344 = vperm.slane %v342, 0
    %346 = vmatpush.msra.mxu0 0.0
    %347 = vmatpush.msra.mxu0 0.0
    %348 = vmatpush.msra.mxu0 0.0
    %349 = vmatpush.msra.mxu0 0.0
    %350 = vmatpush.msra.mxu0 0.0
    %351 = vmatpush.msra.mxu0 0.0
    %352 = vmatpush.msra.mxu0 0.0
    %353 = vmatpush.msra.mxu0 0.0
    %354 = vmatpush.msra.mxu0 0.0
    %355 = vmatpush.msra.mxu0 0.0
    %356 = vmatpush.msra.mxu0 0.0
    %357 = vmatpush.msra.mxu0 0.0
    %358 = vmatpush.msra.mxu0 %v340
    %359 = vmatpush.msra.mxu0 %v339
    %360 = vmatpush.msra.mxu0 %v338
    %361 = vmatpush.msra.mxu0 %v337
    %362 = vmatmul.f32.gmra.mxu0 %v161
    %v363 = vpop.f32.mrf.mxu0
    %v364 = vadd.f32 %v344, %v363
    %365 = vdwg.mxu0
    %s366 = scalar_lea.vmem %s7, 32
    %v367 = vld [vmem:[%s366] sm:$0xff]
    %v368 = vld [vmem:[%s366 + $0x8] sm:$0xff]
    %v369 = vld [vmem:[%s366 + $0x10] sm:$0xff]
    %v370 = vld [vmem:[%s366 + $0x18] sm:$0xff]
    %s371 = scalar_lea.vmem %s10, 1
    %v372 = vld [vmem:[%s371] sm:$0x1]
    %v374 = vperm.slane %v372, 0
    %376 = vmatpush.msra.mxu0 0.0
    %377 = vmatpush.msra.mxu0 0.0
    %378 = vmatpush.msra.mxu0 0.0
    %379 = vmatpush.msra.mxu0 0.0
    %380 = vmatpush.msra.mxu0 0.0
    %381 = vmatpush.msra.mxu0 0.0
    %382 = vmatpush.msra.mxu0 0.0
    %383 = vmatpush.msra.mxu0 0.0
    %384 = vmatpush.msra.mxu0 0.0
    %385 = vmatpush.msra.mxu0 0.0
    %386 = vmatpush.msra.mxu0 0.0
    %387 = vmatpush.msra.mxu0 0.0
    %388 = vmatpush.msra.mxu0 %v370
    %389 = vmatpush.msra.mxu0 %v369
    %390 = vmatpush.msra.mxu0 %v368
    %391 = vmatpush.msra.mxu0 %v367
    %392 = vmatmul.f32.gmra.mxu0 %v161
    %v393 = vpop.f32.mrf.mxu0
    %v394 = vadd.f32 %v374, %v393
    %395 = vdwg.mxu0
    %v397 = vsel %vm242, %v334, 0
    %v400 = vsel %vm242, %v364, 0
    %402 = vmatpush.xpose.msra.mxu0 0.0
    %403 = vmatpush.xpose.msra.mxu0 0.0
    %404 = vmatpush.xpose.msra.mxu0 0.0
    %405 = vmatpush.xpose.msra.mxu0 0.0
    %406 = vmatpush.xpose.msra.mxu0 0.0
    %407 = vmatpush.xpose.msra.mxu0 0.0
    %408 = vmatpush.xpose.msra.mxu0 0.0
    %409 = vmatpush.xpose.msra.mxu0 0.0
    %410 = vmatpush.xpose.msra.mxu0 0.0
    %411 = vmatpush.xpose.msra.mxu0 0.0
    %412 = vmatpush.xpose.msra.mxu0 0.0
    %413 = vmatpush.xpose.msra.mxu0 0.0
    %414 = vmatpush.xpose.msra.mxu0 0.0
    %415 = vmatpush.xpose.msra.mxu0 0.0
    %416 = vmatpush.xpose.msra.mxu0 0.0
    %417 = vmatpush.xpose.msra.mxu0 %v400
    %418 = vmatmul.f32.gmra.mxu0 %v397
    %v419 = vpop.f32.mrf.mxu0
    %v420 = vadd.f32 %v240, %v419
    %421 = vdwg.mxu0
    %v422 = vsel %vm269, %v420, -inf
    %423 = vmax.xlane.f32.xlu0 %v422
    %v424 = vpop.xlane.xlu0 %423
    %v425 = vsub.f32 %v420, %v424
    %v426 = vmul.f32 %v425, 1.442695
    %v427 = vpow.pop %v426
    %v428 = vsel %vm269, %v427, 0.0
    %429 = vadd.xlane.f32.xlu0 %v428
    %v430 = vpop.xlane.xlu0 %429
    %v431 = vrcp.pop %v430
    %v432 = vmul.f32 %v427, %v431
    %v434 = vsel %vm269, %v432, 0
    %436 = vmatpush.msra.mxu0 0.0
    %437 = vmatpush.msra.mxu0 0.0
    %438 = vmatpush.msra.mxu0 0.0
    %439 = vmatpush.msra.mxu0 0.0
    %440 = vmatpush.msra.mxu0 0.0
    %441 = vmatpush.msra.mxu0 0.0
    %442 = vmatpush.msra.mxu0 0.0
    %443 = vmatpush.msra.mxu0 0.0
    %444 = vmatpush.msra.mxu0 0.0
    %445 = vmatpush.msra.mxu0 0.0
    %446 = vmatpush.msra.mxu0 0.0
    %447 = vmatpush.msra.mxu0 0.0
    %448 = vmatpush.msra.mxu0 0.0
    %449 = vmatpush.msra.mxu0 0.0
    %450 = vmatpush.msra.mxu0 0.0
    %451 = vmatpush.msra.mxu0 %v394
    %452 = vmatmul.f32.gmra.mxu0 %v434
    %v453 = vpop.f32.mrf.mxu0
    %v454 = vadd.f32 0.0, %v453
    %455 = vdwg.mxu0
    %s456 = scalar_lea.vmem %s11, 16
    %v457 = vld [vmem:[%s456] sm:$0xff]
    %v458 = vld [vmem:[%s456 + $0x8] sm:$0xff]
    %v460 = vsel %vm242, %v454, 0
    %462 = vmatpush.msra.mxu0 0.0
    %463 = vmatpush.msra.mxu0 0.0
    %464 = vmatpush.msra.mxu0 0.0
    %465 = vmatpush.msra.mxu0 0.0
    %466 = vmatpush.msra.mxu0 0.0
    %467 = vmatpush.msra.mxu0 0.0
    %468 = vmatpush.msra.mxu0 0.0
    %469 = vmatpush.msra.mxu0 0.0
    %470 = vmatpush.msra.mxu0 0.0
    %471 = vmatpush.msra.mxu0 0.0
    %472 = vmatpush.msra.mxu0 0.0
    %473 = vmatpush.msra.mxu0 0.0
    %474 = vmatpush.msra.mxu0 0.0
    %475 = vmatpush.msra.mxu0 0.0
    %476 = vmatpush.msra.mxu0 %v458
    %477 = vmatpush.msra.mxu0 %v457
    %478 = vmatmul.f32.gmra.mxu0 %v460
    %v479 = vpop.f32.mrf.mxu0
    %v480 = vadd.f32 0.0, %v479
    %481 = vdwg.mxu0
    %v483 = vsel %vm242, %v302, 0
    %485 = vmatpush.msra.mxu0 0.0
    %486 = vmatpush.msra.mxu0 0.0
    %487 = vmatpush.msra.mxu0 0.0
    %488 = vmatpush.msra.mxu0 0.0
    %489 = vmatpush.msra.mxu0 0.0
    %490 = vmatpush.msra.mxu0 0.0
    %491 = vmatpush.msra.mxu0 0.0
    %492 = vmatpush.msra.mxu0 0.0
    %493 = vmatpush.msra.mxu0 0.0
    %494 = vmatpush.msra.mxu0 0.0
    %495 = vmatpush.msra.mxu0 0.0
    %496 = vmatpush.msra.mxu0 0.0
    %497 = vmatpush.msra.mxu0 0.0
    %498 = vmatpush.msra.mxu0 0.0
    %499 = vmatpush.msra.mxu0 %v305
    %500 = vmatpush.msra.mxu0 %v304
    %501 = vmatmul.f32.gmra.mxu0 %v483
    %v502 = vpop.f32.mrf.mxu0
    %v503 = vadd.f32 %v480, %v502
    %504 = vdwg.mxu0
    %v505 = vadd.f32 %v113, %v503
    %v507 = vperm.slane %v81, 0
    %v509 = vadd.f32 %v505, %v507
    %v510 = vsel %vm118, %v509, 0.0
    %511 = vadd.xlane.f32.xlu0 %v510
    %v512 = vpop.xlane.xlu0 %511
    %v513 = vmul.f32 %v512, %v128
    %v514 = vsub.f32 %v509, %v513
    %v515 = vmul.f32 %v514, %v514
    %v516 = vsel %vm118, %v515, 0.0
    %517 = vadd.xlane.f32.xlu0 %v516
    %v518 = vpop.xlane.xlu0 %517
    %v519 = vmul.f32 %v518, %v128
    %v520 = vadd.f32 %v519, 1e-05
    %v521 = vrsqrt.pop %v520
    %v522 = vmul.f32 %v521, %v520
    %v523 = vmul.f32 %v522, %v521
    %v524 = vmul.f32 0.5, %v523
    %v525 = vsub.f32 1.5, %v524
    %v526 = vmul.f32 %v521, %v525
    %vm527 = vweird.f32 %v520
    %vm528 = vweird.f32 %v521
    %vm529 = vmor %vm527, %vm528
    %v530 = vsel %vm529, %v521, %v526
    %v531 = vmul.f32 %v514, %v530
    %v532 = vperm.slane %v66, 2
    %v533 = vmul.f32 %v531, %v532
    %v534 = vperm.slane %v66, 3
    %v535 = vadd.f32 %v533, %v534
    %v537 = vperm.slane %v71, 0
    %v540 = vsel %vm118, %v535, 0
    %542 = vmatpush.msra.mxu0 0.0
    %543 = vmatpush.msra.mxu0 0.0
    %544 = vmatpush.msra.mxu0 0.0
    %545 = vmatpush.msra.mxu0 0.0
    %546 = vmatpush.msra.mxu0 0.0
    %547 = vmatpush.msra.mxu0 0.0
    %548 = vmatpush.msra.mxu0 0.0
    %549 = vmatpush.msra.mxu0 0.0
    %550 = vmatpush.msra.mxu0 0.0
    %551 = vmatpush.msra.mxu0 0.0
    %552 = vmatpush.msra.mxu0 0.0
    %553 = vmatpush.msra.mxu0 0.0
    %554 = vmatpush.msra.mxu0 %v70
    %555 = vmatpush.msra.mxu0 %v69
    %556 = vmatpush.msra.mxu0 %v68
    %557 = vmatpush.msra.mxu0 %v67
    %558 = vmatmul.f32.gmra.mxu0 %v540
    %v559 = vpop.f32.mrf.mxu0
    %v560 = vadd.f32 %v537, %v559
    %561 = vdwg.mxu0
    %v562 = vmul.f32 %v560, %v560
    %v563 = vmul.f32 %v560, %v562
    %v564 = vmul.f32 %v563, 0.044715
    %v565 = vadd.f32 %v560, %v564
    %v566 = vmul.f32 %v565, 0.7978846
    %v567 = vtanh.pop %v566
    %v568 = vadd.f32 %v567, 1.0
    %v569 = vmul.f32 %v568, 0.5
    %v570 = vmul.f32 %v560, %v569
    %v572 = vperm.slane %v80, 0
    %v575 = vsel %vm91, %v570, 0
    %577 = vmatpush.msra.mxu0 0.0
    %578 = vmatpush.msra.mxu0 0.0
    %579 = vmatpush.msra.mxu0 0.0
    %580 = vmatpush.msra.mxu0 0.0
    %581 = vmatpush.msra.mxu0 0.0
    %582 = vmatpush.msra.mxu0 0.0
    %583 = vmatpush.msra.mxu0 0.0
    %584 = vmatpush.msra.mxu0 0.0
    %585 = vmatpush.msra.mxu0 %v79
    %586 = vmatpush.msra.mxu0 %v78
    %587 = vmatpush.msra.mxu0 %v77
    %588 = vmatpush.msra.mxu0 %v76
    %589 = vmatpush.msra.mxu0 %v75
    %590 = vmatpush.msra.mxu0 %v74
    %591 = vmatpush.msra.mxu0 %v73
    %592 = vmatpush.msra.mxu0 %v72
    %593 = vmatmul.f32.gmra.mxu0 %v575
    %v594 = vpop.f32.mrf.mxu0
    %v595 = vadd.f32 %v572, %v594
    %596 = vdwg.mxu0
    %v597 = vadd.f32 %v509, %v595
    %598 = vst.msk [vmem:[#allocation2] sm:$0xff] %vm118, %v597
    %s599 = scalar_lea.vmem %s0, 8
    %v600 = vld [vmem:[%s599] sm:$0xff]
    %601 = vset.pattern.permute.xlu0 0
    %602 = vperm.xlu0 %601, %v600
    %v603 = vpop.permute.xlu0 %602
    %vm604 = vcmp.eq.s32.totalorder %v603, %v83
    %v605 = vsel %vm604, 1, 0
    %v606 = vcvt.s32.f32 %v605
    %v608 = vsel %vm91, %v606, 0
    %610 = vmatpush.msra.mxu0 0.0
    %611 = vmatpush.msra.mxu0 0.0
    %612 = vmatpush.msra.mxu0 0.0
    %613 = vmatpush.msra.mxu0 0.0
    %614 = vmatpush.msra.mxu0 0.0
    %615 = vmatpush.msra.mxu0 0.0
    %616 = vmatpush.msra.mxu0 0.0
    %617 = vmatpush.msra.mxu0 0.0
    %618 = vmatpush.msra.mxu0 %v64
    %619 = vmatpush.msra.mxu0 %v63
    %620 = vmatpush.msra.mxu0 %v62
    %621 = vmatpush.msra.mxu0 %v61
    %622 = vmatpush.msra.mxu0 %v60
    %623 = vmatpush.msra.mxu0 %v59
    %624 = vmatpush.msra.mxu0 %v58
    %625 = vmatpush.msra.mxu0 %v57
    %626 = vmatmul.f32.gmra.mxu0 %v608
    %v627 = vpop.f32.mrf.mxu0
    %v628 = vadd.f32 %v65, %v627
    %629 = vdwg.mxu0
    %s630 = scalar_lea.vmem %s1, 1
    %v631 = vld [vmem:[%s630] sm:$0x1]
    %v632 = vsub.f32 1.0, %v631
    %v633 = vmul.f32 %v632, -1e+09
    %v634 = vsel %vm118, %v628, 0.0
    %635 = vadd.xlane.f32.xlu0 %v634
    %v636 = vpop.xlane.xlu0 %635
    %v637 = vmul.f32 %v636, %v128
    %v638 = vsub.f32 %v628, %v637
    %v639 = vmul.f32 %v638, %v638
    %v640 = vsel %vm118, %v639, 0.0
    %641 = vadd.xlane.f32.xlu0 %v640
    %v642 = vpop.xlane.xlu0 %641
    %v643 = vmul.f32 %v642, %v128
    %v644 = vadd.f32 %v643, 1e-05
    %v645 = vrsqrt.pop %v644
    %v646 = vmul.f32 %v645, %v644
    %v647 = vmul.f32 %v646, %v645
    %v648 = vmul.f32 0.5, %v647
    %v649 = vsub.f32 1.5, %v648
    %v650 = vmul.f32 %v645, %v649
    %vm651 = vweird.f32 %v644
    %vm652 = vweird.f32 %v645
    %vm653 = vmor %vm651, %vm652
    %v654 = vsel %vm653, %v645, %v650
    %v655 = vmul.f32 %v638, %v654
    %v656 = vmul.f32 %v655, %v148
    %v657 = vadd.f32 %v656, %v150
    %v658 = vld [vmem:[%s5] sm:$0xff]
    %v659 = vld [vmem:[%s5 + $0x8] sm:$0xff]
    %v660 = vld [vmem:[%s5 + $0x10] sm:$0xff]
    %v661 = vld [vmem:[%s5 + $0x18] sm:$0xff]
    %v662 = vld [vmem:[%s8] sm:$0x1]
    %v664 = vperm.slane %v662, 0
    %v667 = vsel %vm118, %v657, 0
    %669 = vmatpush.msra.mxu0 0.0
    %670 = vmatpush.msra.mxu0 0.0
    %671 = vmatpush.msra.mxu0 0.0
    %672 = vmatpush.msra.mxu0 0.0
    %673 = vmatpush.msra.mxu0 0.0
    %674 = vmatpush.msra.mxu0 0.0
    %675 = vmatpush.msra.mxu0 0.0
    %676 = vmatpush.msra.mxu0 0.0
    %677 = vmatpush.msra.mxu0 0.0
    %678 = vmatpush.msra.mxu0 0.0
    %679 = vmatpush.msra.mxu0 0.0
    %680 = vmatpush.msra.mxu0 0.0
    %681 = vmatpush.msra.mxu0 %v661
    %682 = vmatpush.msra.mxu0 %v660
    %683 = vmatpush.msra.mxu0 %v659
    %684 = vmatpush.msra.mxu0 %v658
    %685 = vmatmul.f32.gmra.mxu0 %v667
    %v686 = vpop.f32.mrf.mxu0
    %v687 = vadd.f32 %v664, %v686
    %688 = vdwg.mxu0
    %v689 = vld [vmem:[%s6] sm:$0xff]
    %v690 = vld [vmem:[%s6 + $0x8] sm:$0xff]
    %v691 = vld [vmem:[%s6 + $0x10] sm:$0xff]
    %v692 = vld [vmem:[%s6 + $0x18] sm:$0xff]
    %v693 = vld [vmem:[%s9] sm:$0x1]
    %v695 = vperm.slane %v693, 0
    %697 = vmatpush.msra.mxu0 0.0
    %698 = vmatpush.msra.mxu0 0.0
    %699 = vmatpush.msra.mxu0 0.0
    %700 = vmatpush.msra.mxu0 0.0
    %701 = vmatpush.msra.mxu0 0.0
    %702 = vmatpush.msra.mxu0 0.0
    %703 = vmatpush.msra.mxu0 0.0
    %704 = vmatpush.msra.mxu0 0.0
    %705 = vmatpush.msra.mxu0 0.0
    %706 = vmatpush.msra.mxu0 0.0
    %707 = vmatpush.msra.mxu0 0.0
    %708 = vmatpush.msra.mxu0 0.0
    %709 = vmatpush.msra.mxu0 %v692
    %710 = vmatpush.msra.mxu0 %v691
    %711 = vmatpush.msra.mxu0 %v690
    %712 = vmatpush.msra.mxu0 %v689
    %713 = vmatmul.f32.gmra.mxu0 %v667
    %v714 = vpop.f32.mrf.mxu0
    %v715 = vadd.f32 %v695, %v714
    %716 = vdwg.mxu0
    %v717 = vld [vmem:[%s7] sm:$0xff]
    %v718 = vld [vmem:[%s7 + $0x8] sm:$0xff]
    %v719 = vld [vmem:[%s7 + $0x10] sm:$0xff]
    %v720 = vld [vmem:[%s7 + $0x18] sm:$0xff]
    %v721 = vld [vmem:[%s10] sm:$0x1]
    %v723 = vperm.slane %v721, 0
    %725 = vmatpush.msra.mxu0 0.0
    %726 = vmatpush.msra.mxu0 0.0
    %727 = vmatpush.msra.mxu0 0.0
    %728 = vmatpush.msra.mxu0 0.0
    %729 = vmatpush.msra.mxu0 0.0
    %730 = vmatpush.msra.mxu0 0.0
    %731 = vmatpush.msra.mxu0 0.0
    %732 = vmatpush.msra.mxu0 0.0
    %733 = vmatpush.msra.mxu0 0.0
    %734 = vmatpush.msra.mxu0 0.0
    %735 = vmatpush.msra.mxu0 0.0
    %736 = vmatpush.msra.mxu0 0.0
    %737 = vmatpush.msra.mxu0 %v720
    %738 = vmatpush.msra.mxu0 %v719
    %739 = vmatpush.msra.mxu0 %v718
    %740 = vmatpush.msra.mxu0 %v717
    %741 = vmatmul.f32.gmra.mxu0 %v667
    %v742 = vpop.f32.mrf.mxu0
    %v743 = vadd.f32 %v723, %v742
    %744 = vdwg.mxu0
    %v746 = vperm.slane %v633, 0
    %v749 = vsel %vm242, %v687, 0
    %v752 = vsel %vm242, %v715, 0
    %754 = vmatpush.xpose.msra.mxu0 0.0
    %755 = vmatpush.xpose.msra.mxu0 0.0
    %756 = vmatpush.xpose.msra.mxu0 0.0
    %757 = vmatpush.xpose.msra.mxu0 0.0
    %758 = vmatpush.xpose.msra.mxu0 0.0
    %759 = vmatpush.xpose.msra.mxu0 0.0
    %760 = vmatpush.xpose.msra.mxu0 0.0
    %761 = vmatpush.xpose.msra.mxu0 0.0
    %762 = vmatpush.xpose.msra.mxu0 0.0
    %763 = vmatpush.xpose.msra.mxu0 0.0
    %764 = vmatpush.xpose.msra.mxu0 0.0
    %765 = vmatpush.xpose.msra.mxu0 0.0
    %766 = vmatpush.xpose.msra.mxu0 0.0
    %767 = vmatpush.xpose.msra.mxu0 0.0
    %768 = vmatpush.xpose.msra.mxu0 0.0
    %769 = vmatpush.xpose.msra.mxu0 %v752
    %770 = vmatmul.f32.gmra.mxu0 %v749
    %v771 = vpop.f32.mrf.mxu0
    %v772 = vadd.f32 %v746, %v771
    %773 = vdwg.mxu0
    %v774 = vsel %vm269, %v772, -inf
    %775 = vmax.xlane.f32.xlu0 %v774
    %v776 = vpop.xlane.xlu0 %775
    %v777 = vsub.f32 %v772, %v776
    %v778 = vmul.f32 %v777, 1.442695
    %v779 = vpow.pop %v778
    %v780 = vsel %vm269, %v779, 0.0
    %781 = vadd.xlane.f32.xlu0 %v780
    %v782 = vpop.xlane.xlu0 %781
    %v783 = vrcp.pop %v782
    %v784 = vmul.f32 %v779, %v783
    %v786 = vsel %vm269, %v784, 0
    %788 = vmatpush.msra.mxu0 0.0
    %789 = vmatpush.msra.mxu0 0.0
    %790 = vmatpush.msra.mxu0 0.0
    %791 = vmatpush.msra.mxu0 0.0
    %792 = vmatpush.msra.mxu0 0.0
    %793 = vmatpush.msra.mxu0 0.0
    %794 = vmatpush.msra.mxu0 0.0
    %795 = vmatpush.msra.mxu0 0.0
    %796 = vmatpush.msra.mxu0 0.0
    %797 = vmatpush.msra.mxu0 0.0
    %798 = vmatpush.msra.mxu0 0.0
    %799 = vmatpush.msra.mxu0 0.0
    %800 = vmatpush.msra.mxu0 0.0
    %801 = vmatpush.msra.mxu0 0.0
    %802 = vmatpush.msra.mxu0 0.0
    %803 = vmatpush.msra.mxu0 %v743
    %804 = vmatmul.f32.gmra.mxu0 %v786
    %v805 = vpop.f32.mrf.mxu0
    %v806 = vadd.f32 0.0, %v805
    %807 = vdwg.mxu0
    %v808 = vld [vmem:[%s11] sm:$0xff]
    %v809 = vld [vmem:[%s11 + $0x8] sm:$0xff]
    %v810 = vld [vmem:[%s306] sm:$0xff]
    %v811 = vld [vmem:[%s306 + $0x8] sm:$0xff]
    %v812 = vld [vmem:[%s306 + $0x10] sm:$0xff]
    %v813 = vld [vmem:[%s306 + $0x18] sm:$0xff]
    %v814 = vld [vmem:[%s311] sm:$0x1]
    %v816 = vperm.slane %v814, 0
    %818 = vmatpush.msra.mxu0 0.0
    %819 = vmatpush.msra.mxu0 0.0
    %820 = vmatpush.msra.mxu0 0.0
    %821 = vmatpush.msra.mxu0 0.0
    %822 = vmatpush.msra.mxu0 0.0
    %823 = vmatpush.msra.mxu0 0.0
    %824 = vmatpush.msra.mxu0 0.0
    %825 = vmatpush.msra.mxu0 0.0
    %826 = vmatpush.msra.mxu0 0.0
    %827 = vmatpush.msra.mxu0 0.0
    %828 = vmatpush.msra.mxu0 0.0
    %829 = vmatpush.msra.mxu0 0.0
    %830 = vmatpush.msra.mxu0 %v813
    %831 = vmatpush.msra.mxu0 %v812
    %832 = vmatpush.msra.mxu0 %v811
    %833 = vmatpush.msra.mxu0 %v810
    %834 = vmatmul.f32.gmra.mxu0 %v667
    %v835 = vpop.f32.mrf.mxu0
    %v836 = vadd.f32 %v816, %v835
    %837 = vdwg.mxu0
    %v838 = vld [vmem:[%s336] sm:$0xff]
    %v839 = vld [vmem:[%s336 + $0x8] sm:$0xff]
    %v840 = vld [vmem:[%s336 + $0x10] sm:$0xff]
    %v841 = vld [vmem:[%s336 + $0x18] sm:$0xff]
    %v842 = vld [vmem:[%s341] sm:$0x1]
    %v844 = vperm.slane %v842, 0
    %846 = vmatpush.msra.mxu0 0.0
    %847 = vmatpush.msra.mxu0 0.0
    %848 = vmatpush.msra.mxu0 0.0
    %849 = vmatpush.msra.mxu0 0.0
    %850 = vmatpush.msra.mxu0 0.0
    %851 = vmatpush.msra.mxu0 0.0
    %852 = vmatpush.msra.mxu0 0.0
    %853 = vmatpush.msra.mxu0 0.0
    %854 = vmatpush.msra.mxu0 0.0
    %855 = vmatpush.msra.mxu0 0.0
    %856 = vmatpush.msra.mxu0 0.0
    %857 = vmatpush.msra.mxu0 0.0
    %858 = vmatpush.msra.mxu0 %v841
    %859 = vmatpush.msra.mxu0 %v840
    %860 = vmatpush.msra.mxu0 %v839
    %861 = vmatpush.msra.mxu0 %v838
    %862 = vmatmul.f32.gmra.mxu0 %v667
    %v863 = vpop.f32.mrf.mxu0
    %v864 = vadd.f32 %v844, %v863
    %865 = vdwg.mxu0
    %v866 = vld [vmem:[%s366] sm:$0xff]
    %v867 = vld [vmem:[%s366 + $0x8] sm:$0xff]
    %v868 = vld [vmem:[%s366 + $0x10] sm:$0xff]
    %v869 = vld [vmem:[%s366 + $0x18] sm:$0xff]
    %v870 = vld [vmem:[%s371] sm:$0x1]
    %v872 = vperm.slane %v870, 0
    %874 = vmatpush.msra.mxu0 0.0
    %875 = vmatpush.msra.mxu0 0.0
    %876 = vmatpush.msra.mxu0 0.0
    %877 = vmatpush.msra.mxu0 0.0
    %878 = vmatpush.msra.mxu0 0.0
    %879 = vmatpush.msra.mxu0 0.0
    %880 = vmatpush.msra.mxu0 0.0
    %881 = vmatpush.msra.mxu0 0.0
    %882 = vmatpush.msra.mxu0 0.0
    %883 = vmatpush.msra.mxu0 0.0
    %884 = vmatpush.msra.mxu0 0.0
    %885 = vmatpush.msra.mxu0 0.0
    %886 = vmatpush.msra.mxu0 %v869
    %887 = vmatpush.msra.mxu0 %v868
    %888 = vmatpush.msra.mxu0 %v867
    %889 = vmatpush.msra.mxu0 %v866
    %890 = vmatmul.f32.gmra.mxu0 %v667
    %v891 = vpop.f32.mrf.mxu0
    %v892 = vadd.f32 %v872, %v891
    %893 = vdwg.mxu0
    %v895 = vsel %vm242, %v836, 0
    %v898 = vsel %vm242, %v864, 0
    %900 = vmatpush.xpose.msra.mxu0 0.0
    %901 = vmatpush.xpose.msra.mxu0 0.0
    %902 = vmatpush.xpose.msra.mxu0 0.0
    %903 = vmatpush.xpose.msra.mxu0 0.0
    %904 = vmatpush.xpose.msra.mxu0 0.0
    %905 = vmatpush.xpose.msra.mxu0 0.0
    %906 = vmatpush.xpose.msra.mxu0 0.0
    %907 = vmatpush.xpose.msra.mxu0 0.0
    %908 = vmatpush.xpose.msra.mxu0 0.0
    %909 = vmatpush.xpose.msra.mxu0 0.0
    %910 = vmatpush.xpose.msra.mxu0 0.0
    %911 = vmatpush.xpose.msra.mxu0 0.0
    %912 = vmatpush.xpose.msra.mxu0 0.0
    %913 = vmatpush.xpose.msra.mxu0 0.0
    %914 = vmatpush.xpose.msra.mxu0 0.0
    %915 = vmatpush.xpose.msra.mxu0 %v898
    %916 = vmatmul.f32.gmra.mxu0 %v895
    %v917 = vpop.f32.mrf.mxu0
    %v918 = vadd.f32 %v746, %v917
    %919 = vdwg.mxu0
    %v920 = vsel %vm269, %v918, -inf
    %921 = vmax.xlane.f32.xlu0 %v920
    %v922 = vpop.xlane.xlu0 %921
    %v923 = vsub.f32 %v918, %v922
    %v924 = vmul.f32 %v923, 1.442695
    %v925 = vpow.pop %v924
    %v926 = vsel %vm269, %v925, 0.0
    %927 = vadd.xlane.f32.xlu0 %v926
    %v928 = vpop.xlane.xlu0 %927
    %v929 = vrcp.pop %v928
    %v930 = vmul.f32 %v925, %v929
    %v932 = vsel %vm269, %v930, 0
    %934 = vmatpush.msra.mxu0 0.0
    %935 = vmatpush.msra.mxu0 0.0
    %936 = vmatpush.msra.mxu0 0.0
    %937 = vmatpush.msra.mxu0 0.0
    %938 = vmatpush.msra.mxu0 0.0
    %939 = vmatpush.msra.mxu0 0.0
    %940 = vmatpush.msra.mxu0 0.0
    %941 = vmatpush.msra.mxu0 0.0
    %942 = vmatpush.msra.mxu0 0.0
    %943 = vmatpush.msra.mxu0 0.0
    %944 = vmatpush.msra.mxu0 0.0
    %945 = vmatpush.msra.mxu0 0.0
    %946 = vmatpush.msra.mxu0 0.0
    %947 = vmatpush.msra.mxu0 0.0
    %948 = vmatpush.msra.mxu0 0.0
    %949 = vmatpush.msra.mxu0 %v892
    %950 = vmatmul.f32.gmra.mxu0 %v932
    %v951 = vpop.f32.mrf.mxu0
    %v952 = vadd.f32 0.0, %v951
    %953 = vdwg.mxu0
    %v954 = vld [vmem:[%s456] sm:$0xff]
    %v955 = vld [vmem:[%s456 + $0x8] sm:$0xff]
    %v957 = vsel %vm242, %v952, 0
    %959 = vmatpush.msra.mxu0 0.0
    %960 = vmatpush.msra.mxu0 0.0
    %961 = vmatpush.msra.mxu0 0.0
    %962 = vmatpush.msra.mxu0 0.0
    %963 = vmatpush.msra.mxu0 0.0
    %964 = vmatpush.msra.mxu0 0.0
    %965 = vmatpush.msra.mxu0 0.0
    %966 = vmatpush.msra.mxu0 0.0
    %967 = vmatpush.msra.mxu0 0.0
    %968 = vmatpush.msra.mxu0 0.0
    %969 = vmatpush.msra.mxu0 0.0
    %970 = vmatpush.msra.mxu0 0.0
    %971 = vmatpush.msra.mxu0 0.0
    %972 = vmatpush.msra.mxu0 0.0
    %973 = vmatpush.msra.mxu0 %v955
    %974 = vmatpush.msra.mxu0 %v954
    %975 = vmatmul.f32.gmra.mxu0 %v957
    %v976 = vpop.f32.mrf.mxu0
    %v977 = vadd.f32 0.0, %v976
    %978 = vdwg.mxu0
    %v980 = vsel %vm242, %v806, 0
    %982 = vmatpush.msra.mxu0 0.0
    %983 = vmatpush.msra.mxu0 0.0
    %984 = vmatpush.msra.mxu0 0.0
    %985 = vmatpush.msra.mxu0 0.0
    %986 = vmatpush.msra.mxu0 0.0
    %987 = vmatpush.msra.mxu0 0.0
    %988 = vmatpush.msra.mxu0 0.0
    %989 = vmatpush.msra.mxu0 0.0
    %990 = vmatpush.msra.mxu0 0.0
    %991 = vmatpush.msra.mxu0 0.0
    %992 = vmatpush.msra.mxu0 0.0
    %993 = vmatpush.msra.mxu0 0.0
    %994 = vmatpush.msra.mxu0 0.0
    %995 = vmatpush.msra.mxu0 0.0
    %996 = vmatpush.msra.mxu0 %v809
    %997 = vmatpush.msra.mxu0 %v808
    %998 = vmatmul.f32.gmra.mxu0 %v980
    %v999 = vpop.f32.mrf.mxu0
    %v1000 = vadd.f32 %v977, %v999
    %1001 = vdwg.mxu0
    %v1002 = vadd.f32 %v628, %v1000
    %v1003 = vadd.f32 %v1002, %v507
    %v1004 = vsel %vm118, %v1003, 0.0
    %1005 = vadd.xlane.f32.xlu0 %v1004
    %v1006 = vpop.xlane.xlu0 %1005
    %v1007 = vmul.f32 %v1006, %v128
    %v1008 = vsub.f32 %v1003, %v1007
    %v1009 = vmul.f32 %v1008, %v1008
    %v1010 = vsel %vm118, %v1009, 0.0
    %1011 = vadd.xlane.f32.xlu0 %v1010
    %v1012 = vpop.xlane.xlu0 %1011
    %v1013 = vmul.f32 %v1012, %v128
    %v1014 = vadd.f32 %v1013, 1e-05
    %v1015 = vrsqrt.pop %v1014
    %v1016 = vmul.f32 %v1015, %v1014
    %v1017 = vmul.f32 %v1016, %v1015
    %v1018 = vmul.f32 0.5, %v1017
    %v1019 = vsub.f32 1.5, %v1018
    %v1020 = vmul.f32 %v1015, %v1019
    %vm1021 = vweird.f32 %v1014
    %vm1022 = vweird.f32 %v1015
    %vm1023 = vmor %vm1021, %vm1022
    %v1024 = vsel %vm1023, %v1015, %v1020
    %v1025 = vmul.f32 %v1008, %v1024
    %v1026 = vmul.f32 %v1025, %v532
    %v1027 = vadd.f32 %v1026, %v534
    %v1029 = vsel %vm118, %v1027, 0
    %1031 = vmatpush.msra.mxu0 0.0
    %1032 = vmatpush.msra.mxu0 0.0
    %1033 = vmatpush.msra.mxu0 0.0
    %1034 = vmatpush.msra.mxu0 0.0
    %1035 = vmatpush.msra.mxu0 0.0
    %1036 = vmatpush.msra.mxu0 0.0
    %1037 = vmatpush.msra.mxu0 0.0
    %1038 = vmatpush.msra.mxu0 0.0
    %1039 = vmatpush.msra.mxu0 0.0
    %1040 = vmatpush.msra.mxu0 0.0
    %1041 = vmatpush.msra.mxu0 0.0
    %1042 = vmatpush.msra.mxu0 0.0
    %1043 = vmatpush.msra.mxu0 %v70
    %1044 = vmatpush.msra.mxu0 %v69
    %1045 = vmatpush.msra.mxu0 %v68
    %1046 = vmatpush.msra.mxu0 %v67
    %1047 = vmatmul.f32.gmra.mxu0 %v1029
    %v1048 = vpop.f32.mrf.mxu0
    %v1049 = vadd.f32 %v537, %v1048
    %1050 = vdwg.mxu0
    %v1051 = vmul.f32 %v1049, %v1049
    %v1052 = vmul.f32 %v1049, %v1051
    %v1053 = vmul.f32 %v1052, 0.044715
    %v1054 = vadd.f32 %v1049, %v1053
    %v1055 = vmul.f32 %v1054, 0.7978846
    %v1056 = vtanh.pop %v1055
    %v1057 = vadd.f32 %v1056, 1.0
    %v1058 = vmul.f32 %v1057, 0.5
    %v1059 = vmul.f32 %v1049, %v1058
    %v1061 = vsel %vm91, %v1059, 0
    %1063 = vmatpush.msra.mxu0 0.0
    %1064 = vmatpush.msra.mxu0 0.0
    %1065 = vmatpush.msra.mxu0 0.0
    %1066 = vmatpush.msra.mxu0 0.0
    %1067 = vmatpush.msra.mxu0 0.0
    %1068 = vmatpush.msra.mxu0 0.0
    %1069 = vmatpush.msra.mxu0 0.0
    %1070 = vmatpush.msra.mxu0 0.0
    %1071 = vmatpush.msra.mxu0 %v79
    %1072 = vmatpush.msra.mxu0 %v78
    %1073 = vmatpush.msra.mxu0 %v77
    %1074 = vmatpush.msra.mxu0 %v76
    %1075 = vmatpush.msra.mxu0 %v75
    %1076 = vmatpush.msra.mxu0 %v74
    %1077 = vmatpush.msra.mxu0 %v73
    %1078 = vmatpush.msra.mxu0 %v72
    %1079 = vmatmul.f32.gmra.mxu0 %v1061
    %v1080 = vpop.f32.mrf.mxu0
    %v1081 = vadd.f32 %v572, %v1080
    %1082 = vdwg.mxu0
    %v1083 = vadd.f32 %v1003, %v1081
    %s1084 = scalar_lea.vmem [#allocation2], 8
    %1085 = vst.msk [vmem:[%s1084] sm:$0xff] %vm118, %v1083
    // Predicated region
    $region70: #{tpu_custom_call.1} parent=1 // pred_check
      _
    $region71: #{tpu_custom_call.1} parent=1 // pred_check_branch
      %1087 = sbr.rel (0) target = $region73
    $region72: #{tpu_custom_call.1} parent=1 // pred_region
      %1089 = vsyncadd [#allocation3], 0
      %s1090 = sshll.u32 [#allocation2], 4
      %s1091 = int_to_ptr.vmem [resolvable:$true] %s1090
      %s1092 = sshll.u32 %s17, 4
      %s1093 = int_to_ptr.hbm [resolvable:$true] %s1092
      %1098 = dma.vmem_to_hbm [thread:$0]  %s1091, 256, %s1093, [#allocation3], 128, 128, 8
    $region73: #{tpu_custom_call.1} parent=1 // pred_fallthru
      _
    // Predicated region
    $region74: #{tpu_custom_call.1} parent=1 // pred_check
      _
    $region75: #{tpu_custom_call.1} parent=1 // pred_check_branch
      %1100 = sbr.rel (0) target = $region77
    $region76: #{tpu_custom_call.1} parent=1 // pred_region
      %1102 = dma.done [#allocation3], 256
    $region77: #{tpu_custom_call.1} parent=1 // pred_fallthru
      _
    %1103 = vsyncpa [#allocation3], 1

</llo_original>
